<compile_context>
chip_gen: v7x
topology: tpu7x:2x2x1
jax: 0.10.0
libtpu: 0.0.40
codegen_flags: <defaults>
</compile_context>

<pallas_src>
import jax
import jax.numpy as jnp
from jax.experimental import pallas as pl
from jax.experimental.pallas import tpu as pltpu


def decoder_att_kernel(ids_ref, emb_ref, enc_ref, h0_ref, c0_ref,
                       wih_ref, whh_ref, bg_ref,
                       wq_ref, bq_ref, wk_ref,
                       wch_ref, wca_ref, bc_ref,
                       wo_ref, bo_ref,
                       logp_ref, h_out_ref, c_out_ref,
                       x_scratch):
    B = h0_ref.shape[0]

    # ---- fused embedding gather: ids in SMEM, (V, E) table resident in VMEM ----
    for b in range(B):                       # B is static and tiny
        x_scratch[pl.ds(b, 1), :] = emb_ref[pl.ds(ids_ref[b], 1), :]
    x = x_scratch[...]                       # (B, E)

    h0 = h0_ref[...]                         # (B, H)
    c0 = c0_ref[...]                         # (B, H)

    # ---- single-step LSTM cell; one small MXU dot per gate (i, f, g, o) ----
    def gate(k):
        return (jnp.dot(x, wih_ref[k], preferred_element_type=jnp.float32)
                + jnp.dot(h0, whh_ref[k], preferred_element_type=jnp.float32)
                + bg_ref[k])                                         # (B, H)

    i_g = jax.nn.sigmoid(gate(0))
    f_g = jax.nn.sigmoid(gate(1))
    g_g = jnp.tanh(gate(2))
    o_g = jax.nn.sigmoid(gate(3))
    c_new = f_g * c0 + i_g * g_g                                     # (B, H)
    h_new = o_g * jnp.tanh(c_new)                                    # (B, H)

    # ---- dot-product attention over encoder outputs ----
    # score[b,s] = <W_k enc[b,s] + b_k, q[b]> ; the b_k term is constant over s
    # and cancels in the softmax, so it is dropped.  Keys never materialized:
    # <W_k e, q> = <e, W_k^T q>  ->  kq = q @ W_k.
    enc = enc_ref[...]                                               # (B, S, H)
    query = (jnp.dot(h_new, wq_ref[...], preferred_element_type=jnp.float32)
             + bq_ref[...])                                          # (B, H)
    kq = jnp.dot(query, wk_ref[...], preferred_element_type=jnp.float32)  # (B, H)

    scores = jnp.sum(enc * kq[:, None, :], axis=-1)                  # (B, S) lane-dense
    m = jnp.max(scores, axis=-1, keepdims=True)
    e = jnp.exp(scores - m)
    dist = e / jnp.sum(e, axis=-1, keepdims=True)                    # (B, S)
    att = jnp.sum(enc * dist[:, :, None], axis=1)                    # (B, H)

    # ---- att_combine(cat(h_new, att)) without an in-kernel concat ----
    combined = (jnp.dot(h_new, wch_ref[...], preferred_element_type=jnp.float32)
                + jnp.dot(att, wca_ref[...], preferred_element_type=jnp.float32)
                + bc_ref[...])                                       # (B, H)

    # ---- output projection + log-softmax over (padded, lane-dense) vocab ----
    logits = (jnp.dot(combined, wo_ref[...], preferred_element_type=jnp.float32)
              + bo_ref[...])                                         # (B, V_pad)
    lmax = jnp.max(logits, axis=-1, keepdims=True)
    lse = lmax + jnp.log(jnp.sum(jnp.exp(logits - lmax), axis=-1, keepdims=True))

    logp_ref[...] = logits - lse
    h_out_ref[...] = combined
    c_out_ref[...] = c_new


def prepare_params(params):
    """One-time weight preprocessing hoisted out of the per-token path."""
    H = params["w_hh"].shape[1]
    V = params["w_out"].shape[0]
    V_pad = ((V + 127) // 128) * 128

    w_ih_t = params["w_ih"].T                                        # (E, 4H)
    w_hh_t = params["w_hh"].T                                        # (H, 4H)
    b_lstm = params["b_ih"] + params["b_hh"]                         # (4H,)
    wih_gates = jnp.stack([w_ih_t[:, k * H:(k + 1) * H] for k in range(4)])   # (4,E,H)
    whh_gates = jnp.stack([w_hh_t[:, k * H:(k + 1) * H] for k in range(4)])   # (4,H,H)
    b_gates = jnp.stack([b_lstm[k * H:(k + 1) * H].reshape(1, H)
                         for k in range(4)])                         # (4,1,H)

    wc_t = params["w_comb"].T                                        # (2H, H)

    wo_t = params["w_out"].T                                         # (H, V)
    bo = params["b_out"].reshape(1, V)
    if V_pad != V:
        # Pad vocab to a lane-dense multiple of 128; padded columns get a huge
        # negative bias so they contribute exp()=0 under log-softmax.
        wo_t = jnp.pad(wo_t, ((0, 0), (0, V_pad - V)))
        bo = jnp.pad(bo, ((0, 0), (0, V_pad - V)), constant_values=-1e30)

    return {
        "embedding": params["embedding"],            # (V, E)
        "wih_gates": wih_gates,
        "whh_gates": whh_gates,
        "b_gates": b_gates,
        "wq_t": params["w_q"].T,                     # (H, H)
        "bq": params["b_q"].reshape(1, H),
        "wk": params["w_k"],                         # (H, H)  intentionally NOT transposed
        "wc_h": wc_t[:H, :],                         # (H, H)  multiplies h_new
        "wc_a": wc_t[H:, :],                         # (H, H)  multiplies att
        "bc": params["b_comb"].reshape(1, H),
        "wo_t": wo_t,                                # (H, V_pad)
        "bo": bo,                                    # (1, V_pad)
    }


def decoder_lstm_att_forward(prep, enc_output, input_ids, hidden, cell):
    """Mirrors DecoderLSTM_Att.forward.

    enc_output: (S, B, H) seq-first; input_ids: (B,) int32;
    hidden/cell: (1, B, H).  Returns (log_probs (B,V), hidden (1,B,H), cell (1,B,H)).
    """
    enc_bf = jnp.transpose(enc_output, (1, 0, 2))    # (B, S, H)
    h0 = hidden[0]
    c0 = cell[0]
    B, _, H = enc_bf.shape
    V, E = prep["embedding"].shape
    V_pad = prep["wo_t"].shape[1]

    vmem = pl.BlockSpec(memory_space=pltpu.MemorySpace.VMEM)
    smem = pl.BlockSpec(memory_space=pltpu.MemorySpace.SMEM)
    out_shapes = (
        jax.ShapeDtypeStruct((B, V_pad), jnp.float32),   # log-probs (padded vocab)
        jax.ShapeDtypeStruct((B, H), jnp.float32),       # attention-combined hidden
        jax.ShapeDtypeStruct((B, H), jnp.float32),       # new cell
    )
    logp, h_out, c_out = pl.pallas_call(
        decoder_att_kernel,
        out_shape=out_shapes,
        in_specs=[smem] + [vmem] * 15,
        out_specs=(vmem, vmem, vmem),
        scratch_shapes=[pltpu.VMEM((B, E), jnp.float32)],
    )(input_ids.astype(jnp.int32),
      prep["embedding"], enc_bf, h0, c0,
      prep["wih_gates"], prep["whh_gates"], prep["b_gates"],
      prep["wq_t"], prep["bq"], prep["wk"],
      prep["wc_h"], prep["wc_a"], prep["bc"],
      prep["wo_t"], prep["bo"])

    if V_pad != V:
        logp = logp[:, :V]
    return logp, h_out[None], c_out[None]


def reference_forward(params, enc_output, input_ids, hidden, cell):
    """Pure-JAX reference matching the PyTorch module exactly."""
    H = params["w_hh"].shape[1]
    emb = jnp.take(params["embedding"], input_ids, axis=0)           # (B, E)
    h0, c0 = hidden[0], cell[0]
    gates = (emb @ params["w_ih"].T + params["b_ih"]
             + h0 @ params["w_hh"].T + params["b_hh"])               # (B, 4H)
    i_g = jax.nn.sigmoid(gates[:, :H])
    f_g = jax.nn.sigmoid(gates[:, H:2 * H])
    g_g = jnp.tanh(gates[:, 2 * H:3 * H])
    o_g = jax.nn.sigmoid(gates[:, 3 * H:])
    c_new = f_g * c0 + i_g * g_g
    h_new = o_g * jnp.tanh(c_new)
    enc = jnp.transpose(enc_output, (1, 0, 2))                       # (B, S, H)
    query = h_new @ params["w_q"].T + params["b_q"]                  # (B, H)
    keys = enc @ params["w_k"].T + params["b_k"]                     # (B, S, H)
    scores = jnp.einsum("bsh,bh->bs", keys, query)
    dist = jax.nn.softmax(scores, axis=-1)
    att = jnp.einsum("bs,bsh->bh", dist, enc)
    combined = (jnp.concatenate([h_new, att], axis=-1) @ params["w_comb"].T
                + params["b_comb"])
    logits = combined @ params["w_out"].T + params["b_out"]
    logp = jax.nn.log_softmax(logits, axis=-1)
    return logp, combined[None], c_new[None]


def init_params(key, embedding_size, hidden_size, output_size):
    E, H, V = embedding_size, hidden_size, output_size
    ks = jax.random.split(key, 13)
    s = 0.1
    f32 = jnp.float32
    return {
        "embedding": jax.random.normal(ks[0], (V, E), f32) * s,
        "w_ih": jax.random.normal(ks[1], (4 * H, E), f32) * s,
        "w_hh": jax.random.normal(ks[2], (4 * H, H), f32) * s,
        "b_ih": jax.random.normal(ks[3], (4 * H,), f32) * s,
        "b_hh": jax.random.normal(ks[4], (4 * H,), f32) * s,
        "w_q": jax.random.normal(ks[5], (H, H), f32) * s,
        "b_q": jax.random.normal(ks[6], (H,), f32) * s,
        "w_k": jax.random.normal(ks[7], (H, H), f32) * s,
        "b_k": jax.random.normal(ks[8], (H,), f32) * s,
        "w_comb": jax.random.normal(ks[9], (H, 2 * H), f32) * s,
        "b_comb": jax.random.normal(ks[10], (H,), f32) * s,
        "w_out": jax.random.normal(ks[11], (V, H), f32) * s,
        "b_out": jax.random.normal(ks[12], (V,), f32) * s,
    }


if __name__ == "__main__":
    E, H, V = 32, 32, 128    # embedding, hidden, vocab (lane-dense multiple of 128)
    B, S = 8, 8              # batch fills the 8 sublanes; encoder length 8

    root = jax.random.PRNGKey(0)
    kp, k_enc, k_in, k_h, k_c = jax.random.split(root, 5)

    params = init_params(kp, E, H, V)
    prep = prepare_params(params)    # one-time preprocessing, out of per-token path

    enc_output = jax.random.normal(k_enc, (S, B, H), jnp.float32)         # (S, B, H)
    input_ids = jax.random.randint(k_in, (B,), 0, V, dtype=jnp.int32)     # (B,)
    hidden = jax.random.normal(k_h, (1, B, H), jnp.float32) * 0.1         # (1, B, H)
    cell = jax.random.normal(k_c, (1, B, H), jnp.float32) * 0.1           # (1, B, H)

    fwd = jax.jit(decoder_lstm_att_forward)
    log_probs, new_hidden, new_cell = fwd(prep, enc_output, input_ids, hidden, cell)
    jax.block_until_ready((log_probs, new_hidden, new_cell))

    assert log_probs.shape == (B, V)
    assert new_hidden.shape == (1, B, H)
    assert new_cell.shape == (1, B, H)

    ref_lp, ref_h, ref_c = reference_forward(params, enc_output, input_ids, hidden, cell)
    assert jnp.allclose(log_probs, ref_lp, atol=1e-3, rtol=1e-3)
    assert jnp.allclose(new_hidden, ref_h, atol=1e-3, rtol=1e-3)
    assert jnp.allclose(new_cell, ref_c, atol=1e-3, rtol=1e-3)

    print("KERNEL_OK")
</pallas_src>

<mosaic_0001>
module attributes {stable_mosaic.version = 11 : i64} {
  func.func @decoder_att_kernel(%arg0: memref<8xi32, #tpu.memory_space<smem>>, %arg1: memref<128x32xf32, #tpu.memory_space<vmem>>, %arg2: memref<8x8x32xf32, #tpu.memory_space<vmem>>, %arg3: memref<8x32xf32, #tpu.memory_space<vmem>>, %arg4: memref<8x32xf32, #tpu.memory_space<vmem>>, %arg5: memref<4x32x32xf32, #tpu.memory_space<vmem>>, %arg6: memref<4x32x32xf32, #tpu.memory_space<vmem>>, %arg7: memref<4x1x32xf32, #tpu.memory_space<vmem>>, %arg8: memref<32x32xf32, #tpu.memory_space<vmem>>, %arg9: memref<1x32xf32, #tpu.memory_space<vmem>>, %arg10: memref<32x32xf32, #tpu.memory_space<vmem>>, %arg11: memref<32x32xf32, #tpu.memory_space<vmem>>, %arg12: memref<32x32xf32, #tpu.memory_space<vmem>>, %arg13: memref<1x32xf32, #tpu.memory_space<vmem>>, %arg14: memref<32x128xf32, #tpu.memory_space<vmem>>, %arg15: memref<1x128xf32, #tpu.memory_space<vmem>>, %arg16: memref<8x128xf32, #tpu.memory_space<vmem>>, %arg17: memref<8x32xf32, #tpu.memory_space<vmem>>, %arg18: memref<8x32xf32, #tpu.memory_space<vmem>>, %arg19: memref<8x32xf32, #tpu.memory_space<vmem>>) attributes {dimension_semantics = [], scalar_prefetch = 0 : i64, scratch_operands = 1 : i64, tpu.core_type = #tpu.core_type<tc>} {
    %c0 = arith.constant 0 : index
    %0 = memref.load %arg0[%c0] : memref<8xi32, #tpu.memory_space<smem>>
    %1 = arith.index_cast %0 : i32 to index
    %c0_0 = arith.constant 0 : index
    %2 = vector.load %arg1[%1, %c0_0] : memref<128x32xf32, #tpu.memory_space<vmem>>, vector<1x32xf32>
    %c0_1 = arith.constant 0 : index
    %c0_2 = arith.constant 0 : index
    %3 = vector.load %arg19[%c0_1, %c0_2] : memref<8x32xf32, #tpu.memory_space<vmem>>, vector<1x32xf32>
    tpu.vector_store %arg19[%c0_1, %c0_2], %2 {strides = array<i32>} : memref<8x32xf32, #tpu.memory_space<vmem>>, vector<1x32xf32>,
    %c1 = arith.constant 1 : index
    %4 = memref.load %arg0[%c1] : memref<8xi32, #tpu.memory_space<smem>>
    %5 = arith.index_cast %4 : i32 to index
    %c0_3 = arith.constant 0 : index
    %6 = vector.load %arg1[%5, %c0_3] : memref<128x32xf32, #tpu.memory_space<vmem>>, vector<1x32xf32>
    %c1_4 = arith.constant 1 : index
    %c0_5 = arith.constant 0 : index
    %7 = vector.load %arg19[%c1_4, %c0_5] : memref<8x32xf32, #tpu.memory_space<vmem>>, vector<1x32xf32>
    tpu.vector_store %arg19[%c1_4, %c0_5], %6 {strides = array<i32>} : memref<8x32xf32, #tpu.memory_space<vmem>>, vector<1x32xf32>,
    %c2 = arith.constant 2 : index
    %8 = memref.load %arg0[%c2] : memref<8xi32, #tpu.memory_space<smem>>
    %9 = arith.index_cast %8 : i32 to index
    %c0_6 = arith.constant 0 : index
    %10 = vector.load %arg1[%9, %c0_6] : memref<128x32xf32, #tpu.memory_space<vmem>>, vector<1x32xf32>
    %c2_7 = arith.constant 2 : index
    %c0_8 = arith.constant 0 : index
    %11 = vector.load %arg19[%c2_7, %c0_8] : memref<8x32xf32, #tpu.memory_space<vmem>>, vector<1x32xf32>
    tpu.vector_store %arg19[%c2_7, %c0_8], %10 {strides = array<i32>} : memref<8x32xf32, #tpu.memory_space<vmem>>, vector<1x32xf32>,
    %c3 = arith.constant 3 : index
    %12 = memref.load %arg0[%c3] : memref<8xi32, #tpu.memory_space<smem>>
    %13 = arith.index_cast %12 : i32 to index
    %c0_9 = arith.constant 0 : index
    %14 = vector.load %arg1[%13, %c0_9] : memref<128x32xf32, #tpu.memory_space<vmem>>, vector<1x32xf32>
    %c3_10 = arith.constant 3 : index
    %c0_11 = arith.constant 0 : index
    %15 = vector.load %arg19[%c3_10, %c0_11] : memref<8x32xf32, #tpu.memory_space<vmem>>, vector<1x32xf32>
    tpu.vector_store %arg19[%c3_10, %c0_11], %14 {strides = array<i32>} : memref<8x32xf32, #tpu.memory_space<vmem>>, vector<1x32xf32>,
    %c4 = arith.constant 4 : index
    %16 = memref.load %arg0[%c4] : memref<8xi32, #tpu.memory_space<smem>>
    %17 = arith.index_cast %16 : i32 to index
    %c0_12 = arith.constant 0 : index
    %18 = vector.load %arg1[%17, %c0_12] : memref<128x32xf32, #tpu.memory_space<vmem>>, vector<1x32xf32>
    %c4_13 = arith.constant 4 : index
    %c0_14 = arith.constant 0 : index
    %19 = vector.load %arg19[%c4_13, %c0_14] : memref<8x32xf32, #tpu.memory_space<vmem>>, vector<1x32xf32>
    tpu.vector_store %arg19[%c4_13, %c0_14], %18 {strides = array<i32>} : memref<8x32xf32, #tpu.memory_space<vmem>>, vector<1x32xf32>,
    %c5 = arith.constant 5 : index
    %20 = memref.load %arg0[%c5] : memref<8xi32, #tpu.memory_space<smem>>
    %21 = arith.index_cast %20 : i32 to index
    %c0_15 = arith.constant 0 : index
    %22 = vector.load %arg1[%21, %c0_15] : memref<128x32xf32, #tpu.memory_space<vmem>>, vector<1x32xf32>
    %c5_16 = arith.constant 5 : index
    %c0_17 = arith.constant 0 : index
    %23 = vector.load %arg19[%c5_16, %c0_17] : memref<8x32xf32, #tpu.memory_space<vmem>>, vector<1x32xf32>
    tpu.vector_store %arg19[%c5_16, %c0_17], %22 {strides = array<i32>} : memref<8x32xf32, #tpu.memory_space<vmem>>, vector<1x32xf32>,
    %c6 = arith.constant 6 : index
    %24 = memref.load %arg0[%c6] : memref<8xi32, #tpu.memory_space<smem>>
    %25 = arith.index_cast %24 : i32 to index
    %c0_18 = arith.constant 0 : index
    %26 = vector.load %arg1[%25, %c0_18] : memref<128x32xf32, #tpu.memory_space<vmem>>, vector<1x32xf32>
    %c6_19 = arith.constant 6 : index
    %c0_20 = arith.constant 0 : index
    %27 = vector.load %arg19[%c6_19, %c0_20] : memref<8x32xf32, #tpu.memory_space<vmem>>, vector<1x32xf32>
    tpu.vector_store %arg19[%c6_19, %c0_20], %26 {strides = array<i32>} : memref<8x32xf32, #tpu.memory_space<vmem>>, vector<1x32xf32>,
    %c7 = arith.constant 7 : index
    %28 = memref.load %arg0[%c7] : memref<8xi32, #tpu.memory_space<smem>>
    %29 = arith.index_cast %28 : i32 to index
    %c0_21 = arith.constant 0 : index
    %30 = vector.load %arg1[%29, %c0_21] : memref<128x32xf32, #tpu.memory_space<vmem>>, vector<1x32xf32>
    %c7_22 = arith.constant 7 : index
    %c0_23 = arith.constant 0 : index
    %31 = vector.load %arg19[%c7_22, %c0_23] : memref<8x32xf32, #tpu.memory_space<vmem>>, vector<1x32xf32>
    tpu.vector_store %arg19[%c7_22, %c0_23], %30 {strides = array<i32>} : memref<8x32xf32, #tpu.memory_space<vmem>>, vector<1x32xf32>,
    %c0_24 = arith.constant 0 : index
    %c0_25 = arith.constant 0 : index
    %32 = vector.load %arg19[%c0_24, %c0_25] : memref<8x32xf32, #tpu.memory_space<vmem>>, vector<8x32xf32>
    %c0_26 = arith.constant 0 : index
    %c0_27 = arith.constant 0 : index
    %33 = vector.load %arg3[%c0_26, %c0_27] : memref<8x32xf32, #tpu.memory_space<vmem>>, vector<8x32xf32>
    %c0_28 = arith.constant 0 : index
    %c0_29 = arith.constant 0 : index
    %34 = vector.load %arg4[%c0_28, %c0_29] : memref<8x32xf32, #tpu.memory_space<vmem>>, vector<8x32xf32>
    %c0_30 = arith.constant 0 : index
    %c0_31 = arith.constant 0 : index
    %c0_32 = arith.constant 0 : index
    %35 = vector.load %arg5[%c0_30, %c0_31, %c0_32] : memref<4x32x32xf32, #tpu.memory_space<vmem>>, vector<1x32x32xf32>
    %36 = vector.shape_cast %35 : vector<1x32x32xf32> to vector<32x32xf32>
    %cst = arith.constant dense<0.000000e+00> : vector<8x32xf32>
    %37 = tpu.matmul %32, %36, %cst {dimension_numbers = #tpu.dot_dimension_numbers<[1], [0], [0], [1], [0, 0, 1, 1], [], []>} : vector<8x32xf32>, vector<32x32xf32>, vector<8x32xf32> -> vector<8x32xf32>
    %c0_33 = arith.constant 0 : index
    %c0_34 = arith.constant 0 : index
    %c0_35 = arith.constant 0 : index
    %38 = vector.load %arg6[%c0_33, %c0_34, %c0_35] : memref<4x32x32xf32, #tpu.memory_space<vmem>>, vector<1x32x32xf32>
    %39 = vector.shape_cast %38 : vector<1x32x32xf32> to vector<32x32xf32>
    %cst_36 = arith.constant dense<0.000000e+00> : vector<8x32xf32>
    %40 = tpu.matmul %33, %39, %cst_36 {dimension_numbers = #tpu.dot_dimension_numbers<[1], [0], [0], [1], [0, 0, 1, 1], [], []>} : vector<8x32xf32>, vector<32x32xf32>, vector<8x32xf32> -> vector<8x32xf32>
    %41 = arith.addf %37, %40 : vector<8x32xf32>
    %c0_37 = arith.constant 0 : index
    %c0_38 = arith.constant 0 : index
    %c0_39 = arith.constant 0 : index
    %42 = vector.load %arg7[%c0_37, %c0_38, %c0_39] : memref<4x1x32xf32, #tpu.memory_space<vmem>>, vector<1x1x32xf32>
    %43 = vector.shape_cast %42 : vector<1x1x32xf32> to vector<1x32xf32>
    %44 = vector.broadcast %43 : vector<1x32xf32> to vector<8x32xf32>
    %45 = arith.addf %41, %44 : vector<8x32xf32>
    %46 = arith.negf %45 : vector<8x32xf32>
    %47 = math.exp %46 : vector<8x32xf32>
    %cst_40 = arith.constant 1.000000e+00 : f32
    %48 = vector.broadcast %cst_40 : f32 to vector<8x32xf32>
    %49 = arith.addf %48, %47 : vector<8x32xf32>
    %50 = arith.divf %48, %49 : vector<8x32xf32>
    %c1_41 = arith.constant 1 : index
    %c0_42 = arith.constant 0 : index
    %c0_43 = arith.constant 0 : index
    %51 = vector.load %arg5[%c1_41, %c0_42, %c0_43] : memref<4x32x32xf32, #tpu.memory_space<vmem>>, vector<1x32x32xf32>
    %52 = vector.shape_cast %51 : vector<1x32x32xf32> to vector<32x32xf32>
    %cst_44 = arith.constant dense<0.000000e+00> : vector<8x32xf32>
    %53 = tpu.matmul %32, %52, %cst_44 {dimension_numbers = #tpu.dot_dimension_numbers<[1], [0], [0], [1], [0, 0, 1, 1], [], []>} : vector<8x32xf32>, vector<32x32xf32>, vector<8x32xf32> -> vector<8x32xf32>
    %c1_45 = arith.constant 1 : index
    %c0_46 = arith.constant 0 : index
    %c0_47 = arith.constant 0 : index
    %54 = vector.load %arg6[%c1_45, %c0_46, %c0_47] : memref<4x32x32xf32, #tpu.memory_space<vmem>>, vector<1x32x32xf32>
    %55 = vector.shape_cast %54 : vector<1x32x32xf32> to vector<32x32xf32>
    %cst_48 = arith.constant dense<0.000000e+00> : vector<8x32xf32>
    %56 = tpu.matmul %33, %55, %cst_48 {dimension_numbers = #tpu.dot_dimension_numbers<[1], [0], [0], [1], [0, 0, 1, 1], [], []>} : vector<8x32xf32>, vector<32x32xf32>, vector<8x32xf32> -> vector<8x32xf32>
    %57 = arith.addf %53, %56 : vector<8x32xf32>
    %c1_49 = arith.constant 1 : index
    %c0_50 = arith.constant 0 : index
    %c0_51 = arith.constant 0 : index
    %58 = vector.load %arg7[%c1_49, %c0_50, %c0_51] : memref<4x1x32xf32, #tpu.memory_space<vmem>>, vector<1x1x32xf32>
    %59 = vector.shape_cast %58 : vector<1x1x32xf32> to vector<1x32xf32>
    %60 = vector.broadcast %59 : vector<1x32xf32> to vector<8x32xf32>
    %61 = arith.addf %57, %60 : vector<8x32xf32>
    %62 = arith.negf %61 : vector<8x32xf32>
    %63 = math.exp %62 : vector<8x32xf32>
    %cst_52 = arith.constant 1.000000e+00 : f32
    %64 = vector.broadcast %cst_52 : f32 to vector<8x32xf32>
    %65 = arith.addf %64, %63 : vector<8x32xf32>
    %66 = arith.divf %64, %65 : vector<8x32xf32>
    %c2_53 = arith.constant 2 : index
    %c0_54 = arith.constant 0 : index
    %c0_55 = arith.constant 0 : index
    %67 = vector.load %arg5[%c2_53, %c0_54, %c0_55] : memref<4x32x32xf32, #tpu.memory_space<vmem>>, vector<1x32x32xf32>
    %68 = vector.shape_cast %67 : vector<1x32x32xf32> to vector<32x32xf32>
    %cst_56 = arith.constant dense<0.000000e+00> : vector<8x32xf32>
    %69 = tpu.matmul %32, %68, %cst_56 {dimension_numbers = #tpu.dot_dimension_numbers<[1], [0], [0], [1], [0, 0, 1, 1], [], []>} : vector<8x32xf32>, vector<32x32xf32>, vector<8x32xf32> -> vector<8x32xf32>
    %c2_57 = arith.constant 2 : index
    %c0_58 = arith.constant 0 : index
    %c0_59 = arith.constant 0 : index
    %70 = vector.load %arg6[%c2_57, %c0_58, %c0_59] : memref<4x32x32xf32, #tpu.memory_space<vmem>>, vector<1x32x32xf32>
    %71 = vector.shape_cast %70 : vector<1x32x32xf32> to vector<32x32xf32>
    %cst_60 = arith.constant dense<0.000000e+00> : vector<8x32xf32>
    %72 = tpu.matmul %33, %71, %cst_60 {dimension_numbers = #tpu.dot_dimension_numbers<[1], [0], [0], [1], [0, 0, 1, 1], [], []>} : vector<8x32xf32>, vector<32x32xf32>, vector<8x32xf32> -> vector<8x32xf32>
    %73 = arith.addf %69, %72 : vector<8x32xf32>
    %c2_61 = arith.constant 2 : index
    %c0_62 = arith.constant 0 : index
    %c0_63 = arith.constant 0 : index
    %74 = vector.load %arg7[%c2_61, %c0_62, %c0_63] : memref<4x1x32xf32, #tpu.memory_space<vmem>>, vector<1x1x32xf32>
    %75 = vector.shape_cast %74 : vector<1x1x32xf32> to vector<1x32xf32>
    %76 = vector.broadcast %75 : vector<1x32xf32> to vector<8x32xf32>
    %77 = arith.addf %73, %76 : vector<8x32xf32>
    %78 = math.tanh %77 : vector<8x32xf32>
    %c3_64 = arith.constant 3 : index
    %c0_65 = arith.constant 0 : index
    %c0_66 = arith.constant 0 : index
    %79 = vector.load %arg5[%c3_64, %c0_65, %c0_66] : memref<4x32x32xf32, #tpu.memory_space<vmem>>, vector<1x32x32xf32>
    %80 = vector.shape_cast %79 : vector<1x32x32xf32> to vector<32x32xf32>
    %cst_67 = arith.constant dense<0.000000e+00> : vector<8x32xf32>
    %81 = tpu.matmul %32, %80, %cst_67 {dimension_numbers = #tpu.dot_dimension_numbers<[1], [0], [0], [1], [0, 0, 1, 1], [], []>} : vector<8x32xf32>, vector<32x32xf32>, vector<8x32xf32> -> vector<8x32xf32>
    %c3_68 = arith.constant 3 : index
    %c0_69 = arith.constant 0 : index
    %c0_70 = arith.constant 0 : index
    %82 = vector.load %arg6[%c3_68, %c0_69, %c0_70] : memref<4x32x32xf32, #tpu.memory_space<vmem>>, vector<1x32x32xf32>
    %83 = vector.shape_cast %82 : vector<1x32x32xf32> to vector<32x32xf32>
    %cst_71 = arith.constant dense<0.000000e+00> : vector<8x32xf32>
    %84 = tpu.matmul %33, %83, %cst_71 {dimension_numbers = #tpu.dot_dimension_numbers<[1], [0], [0], [1], [0, 0, 1, 1], [], []>} : vector<8x32xf32>, vector<32x32xf32>, vector<8x32xf32> -> vector<8x32xf32>
    %85 = arith.addf %81, %84 : vector<8x32xf32>
    %c3_72 = arith.constant 3 : index
    %c0_73 = arith.constant 0 : index
    %c0_74 = arith.constant 0 : index
    %86 = vector.load %arg7[%c3_72, %c0_73, %c0_74] : memref<4x1x32xf32, #tpu.memory_space<vmem>>, vector<1x1x32xf32>
    %87 = vector.shape_cast %86 : vector<1x1x32xf32> to vector<1x32xf32>
    %88 = vector.broadcast %87 : vector<1x32xf32> to vector<8x32xf32>
    %89 = arith.addf %85, %88 : vector<8x32xf32>
    %90 = arith.negf %89 : vector<8x32xf32>
    %91 = math.exp %90 : vector<8x32xf32>
    %cst_75 = arith.constant 1.000000e+00 : f32
    %92 = vector.broadcast %cst_75 : f32 to vector<8x32xf32>
    %93 = arith.addf %92, %91 : vector<8x32xf32>
    %94 = arith.divf %92, %93 : vector<8x32xf32>
    %95 = arith.mulf %66, %34 : vector<8x32xf32>
    %96 = arith.mulf %50, %78 : vector<8x32xf32>
    %97 = arith.addf %95, %96 : vector<8x32xf32>
    %98 = math.tanh %97 : vector<8x32xf32>
    %99 = arith.mulf %94, %98 : vector<8x32xf32>
    %c0_76 = arith.constant 0 : index
    %c0_77 = arith.constant 0 : index
    %c0_78 = arith.constant 0 : index
    %100 = vector.load %arg2[%c0_76, %c0_77, %c0_78] : memref<8x8x32xf32, #tpu.memory_space<vmem>>, vector<8x8x32xf32>
    %c0_79 = arith.constant 0 : index
    %c0_80 = arith.constant 0 : index
    %101 = vector.load %arg8[%c0_79, %c0_80] : memref<32x32xf32, #tpu.memory_space<vmem>>, vector<32x32xf32>
    %cst_81 = arith.constant dense<0.000000e+00> : vector<8x32xf32>
    %102 = tpu.matmul %99, %101, %cst_81 {dimension_numbers = #tpu.dot_dimension_numbers<[1], [0], [0], [1], [0, 0, 1, 1], [], []>} : vector<8x32xf32>, vector<32x32xf32>, vector<8x32xf32> -> vector<8x32xf32>
    %c0_82 = arith.constant 0 : index
    %c0_83 = arith.constant 0 : index
    %103 = vector.load %arg9[%c0_82, %c0_83] : memref<1x32xf32, #tpu.memory_space<vmem>>, vector<1x32xf32>
    %104 = vector.broadcast %103 : vector<1x32xf32> to vector<8x32xf32>
    %105 = arith.addf %102, %104 : vector<8x32xf32>
    %c0_84 = arith.constant 0 : index
    %c0_85 = arith.constant 0 : index
    %106 = vector.load %arg10[%c0_84, %c0_85] : memref<32x32xf32, #tpu.memory_space<vmem>>, vector<32x32xf32>
    %cst_86 = arith.constant dense<0.000000e+00> : vector<8x32xf32>
    %107 = tpu.matmul %105, %106, %cst_86 {dimension_numbers = #tpu.dot_dimension_numbers<[1], [0], [0], [1], [0, 0, 1, 1], [], []>} : vector<8x32xf32>, vector<32x32xf32>, vector<8x32xf32> -> vector<8x32xf32>
    %108 = vector.shape_cast %107 : vector<8x32xf32> to vector<8x1x32xf32>
    %109 = vector.broadcast %108 : vector<8x1x32xf32> to vector<8x8x32xf32>
    %110 = arith.mulf %100, %109 : vector<8x8x32xf32>
    %cst_87 = arith.constant dense<0.000000e+00> : vector<8x8xf32>
    %111 = vector.multi_reduction <add>, %110, %cst_87 [2] : vector<8x8x32xf32> to vector<8x8xf32>
    %cst_88 = arith.constant dense<0xFF800000> : vector<8xf32>
    %112 = vector.multi_reduction <maximumf>, %111, %cst_88 [1] : vector<8x8xf32> to vector<8xf32>
    %113 = vector.shape_cast %112 : vector<8xf32> to vector<8x1xf32>
    %114 = vector.broadcast %113 : vector<8x1xf32> to vector<8x8xf32>
    %115 = arith.subf %111, %114 : vector<8x8xf32>
    %116 = math.exp %115 : vector<8x8xf32>
    %cst_89 = arith.constant dense<0.000000e+00> : vector<8xf32>
    %117 = vector.multi_reduction <add>, %116, %cst_89 [1] : vector<8x8xf32> to vector<8xf32>
    %118 = vector.shape_cast %117 : vector<8xf32> to vector<8x1xf32>
    %119 = vector.broadcast %118 : vector<8x1xf32> to vector<8x8xf32>
    %120 = arith.divf %116, %119 : vector<8x8xf32>
    %121 = vector.shape_cast %120 : vector<8x8xf32> to vector<8x8x1xf32>
    %122 = vector.broadcast %121 : vector<8x8x1xf32> to vector<8x8x32xf32>
    %123 = arith.mulf %100, %122 : vector<8x8x32xf32>
    %cst_90 = arith.constant dense<0.000000e+00> : vector<8x32xf32>
    %124 = vector.multi_reduction <add>, %123, %cst_90 [1] : vector<8x8x32xf32> to vector<8x32xf32>
    %c0_91 = arith.constant 0 : index
    %c0_92 = arith.constant 0 : index
    %125 = vector.load %arg11[%c0_91, %c0_92] : memref<32x32xf32, #tpu.memory_space<vmem>>, vector<32x32xf32>
    %cst_93 = arith.constant dense<0.000000e+00> : vector<8x32xf32>
    %126 = tpu.matmul %99, %125, %cst_93 {dimension_numbers = #tpu.dot_dimension_numbers<[1], [0], [0], [1], [0, 0, 1, 1], [], []>} : vector<8x32xf32>, vector<32x32xf32>, vector<8x32xf32> -> vector<8x32xf32>
    %c0_94 = arith.constant 0 : index
    %c0_95 = arith.constant 0 : index
    %127 = vector.load %arg12[%c0_94, %c0_95] : memref<32x32xf32, #tpu.memory_space<vmem>>, vector<32x32xf32>
    %cst_96 = arith.constant dense<0.000000e+00> : vector<8x32xf32>
    %128 = tpu.matmul %124, %127, %cst_96 {dimension_numbers = #tpu.dot_dimension_numbers<[1], [0], [0], [1], [0, 0, 1, 1], [], []>} : vector<8x32xf32>, vector<32x32xf32>, vector<8x32xf32> -> vector<8x32xf32>
    %129 = arith.addf %126, %128 : vector<8x32xf32>
    %c0_97 = arith.constant 0 : index
    %c0_98 = arith.constant 0 : index
    %130 = vector.load %arg13[%c0_97, %c0_98] : memref<1x32xf32, #tpu.memory_space<vmem>>, vector<1x32xf32>
    %131 = vector.broadcast %130 : vector<1x32xf32> to vector<8x32xf32>
    %132 = arith.addf %129, %131 : vector<8x32xf32>
    %c0_99 = arith.constant 0 : index
    %c0_100 = arith.constant 0 : index
    %133 = vector.load %arg14[%c0_99, %c0_100] : memref<32x128xf32, #tpu.memory_space<vmem>>, vector<32x128xf32>
    %cst_101 = arith.constant dense<0.000000e+00> : vector<8x128xf32>
    %134 = tpu.matmul %132, %133, %cst_101 {dimension_numbers = #tpu.dot_dimension_numbers<[1], [0], [0], [1], [0, 0, 1, 1], [], []>} : vector<8x32xf32>, vector<32x128xf32>, vector<8x128xf32> -> vector<8x128xf32>
    %c0_102 = arith.constant 0 : index
    %c0_103 = arith.constant 0 : index
    %135 = vector.load %arg15[%c0_102, %c0_103] : memref<1x128xf32, #tpu.memory_space<vmem>>, vector<1x128xf32>
    %136 = vector.broadcast %135 : vector<1x128xf32> to vector<8x128xf32>
    %137 = arith.addf %134, %136 : vector<8x128xf32>
    %cst_104 = arith.constant dense<0xFF800000> : vector<8xf32>
    %138 = vector.multi_reduction <maximumf>, %137, %cst_104 [1] : vector<8x128xf32> to vector<8xf32>
    %139 = vector.shape_cast %138 : vector<8xf32> to vector<8x1xf32>
    %140 = vector.broadcast %139 : vector<8x1xf32> to vector<8x128xf32>
    %141 = arith.subf %137, %140 : vector<8x128xf32>
    %142 = math.exp %141 : vector<8x128xf32>
    %cst_105 = arith.constant dense<0.000000e+00> : vector<8xf32>
    %143 = vector.multi_reduction <add>, %142, %cst_105 [1] : vector<8x128xf32> to vector<8xf32>
    %144 = vector.shape_cast %143 : vector<8xf32> to vector<8x1xf32>
    %145 = math.log %144 : vector<8x1xf32>
    %146 = arith.addf %139, %145 : vector<8x1xf32>
    %147 = vector.broadcast %146 : vector<8x1xf32> to vector<8x128xf32>
    %148 = arith.subf %137, %147 : vector<8x128xf32>
    %c0_106 = arith.constant 0 : index
    %c0_107 = arith.constant 0 : index
    %149 = vector.load %arg16[%c0_106, %c0_107] : memref<8x128xf32, #tpu.memory_space<vmem>>, vector<8x128xf32>
    tpu.vector_store %arg16[%c0_106, %c0_107], %148 {strides = array<i32>} : memref<8x128xf32, #tpu.memory_space<vmem>>, vector<8x128xf32>,
    %c0_108 = arith.constant 0 : index
    %c0_109 = arith.constant 0 : index
    %150 = vector.load %arg17[%c0_108, %c0_109] : memref<8x32xf32, #tpu.memory_space<vmem>>, vector<8x32xf32>
    tpu.vector_store %arg17[%c0_108, %c0_109], %132 {strides = array<i32>} : memref<8x32xf32, #tpu.memory_space<vmem>>, vector<8x32xf32>,
    %c0_110 = arith.constant 0 : index
    %c0_111 = arith.constant 0 : index
    %151 = vector.load %arg18[%c0_110, %c0_111] : memref<8x32xf32, #tpu.memory_space<vmem>>, vector<8x32xf32>
    tpu.vector_store %arg18[%c0_110, %c0_111], %97 {strides = array<i32>} : memref<8x32xf32, #tpu.memory_space<vmem>>, vector<8x32xf32>,
    return
  }
}

</mosaic_0001>

<llo_original>
// kernel: decoder_lstm_att_forward.1
$region0: #{decoder_lstm_att_forward.1}
  #allocation0 [shape = 'u32[]', space=smem, size = 0x4, offset = 0x4, fixed_abs, tag = 'smem constant byte address 0x4 - core index']
  #allocation1 [shape = 'u32[144,128]{1,0:T(1,128)}', space=vmem, size = 0x12000, scoped, tag = 'internal scratch']
  #allocation2 [shape = 'f32[8,32]{1,0:T(8,128)}', space=vmem, size = 0x1000, scoped, tag = 'scratch operand']
  %s0 = inlined_call_operand.vmem [shape: s32[8], index: 0, kind: input, shape index: {}]
  %s1 = inlined_call_operand.vmem [shape: f32[128,32], index: 1, kind: input, shape index: {}]
  %s2 = inlined_call_operand.vmem [shape: f32[8,8,32], index: 2, kind: input, shape index: {}]
  %s3 = inlined_call_operand.vmem [shape: f32[8,32], index: 3, kind: input, shape index: {}]
  %s4 = inlined_call_operand.vmem [shape: f32[8,32], index: 4, kind: input, shape index: {}]
  %s5 = inlined_call_operand.vmem [shape: f32[4,32,32], index: 5, kind: input, shape index: {}]
  %s6 = inlined_call_operand.vmem [shape: f32[4,32,32], index: 6, kind: input, shape index: {}]
  %s7 = inlined_call_operand.hbm [shape: f32[4,1,32], index: 7, kind: input, shape index: {}]
  %s8 = inlined_call_operand.vmem [shape: f32[32,32], index: 8, kind: input, shape index: {}]
  %s9 = inlined_call_operand.hbm [shape: f32[1,32], index: 9, kind: input, shape index: {}]
  %s10 = inlined_call_operand.hbm [shape: f32[32,32], index: 10, kind: input, shape index: {}]
  %s11 = inlined_call_operand.hbm [shape: f32[32,32], index: 11, kind: input, shape index: {}]
  %s12 = inlined_call_operand.hbm [shape: f32[32,32], index: 12, kind: input, shape index: {}]
  %s13 = inlined_call_operand.hbm [shape: f32[1,32], index: 13, kind: input, shape index: {}]
  %s14 = inlined_call_operand.hbm [shape: f32[32,128], index: 14, kind: input, shape index: {}]
  %s15 = inlined_call_operand.hbm [shape: f32[1,128], index: 15, kind: input, shape index: {}]
  %s16 = inlined_call_operand.hbm [shape: f32[8,128], index: 16, kind: output, shape index: {0}]
  %s17 = inlined_call_operand.hbm [shape: f32[8,32], index: 17, kind: output, shape index: {1}]
  %s18 = inlined_call_operand.hbm [shape: f32[8,32], index: 18, kind: output, shape index: {2}]
  %19 = xla_tuple %s16, %s17, %s18
  %s20 = sld [smem:[#allocation0]]
  $region126: #{decoder_lstm_att_forward.1} parent=0
    _
  %s22 = ssub.s32 1, %s20
  %s23 = scalar_select 0, %s22, %s20
  $region1: #{decoder_lstm_att_forward.1} parent=0
    #allocation3 [shape = 'u8[512]{0}', space=smem, size = 0x200, scoped, tag = 'input window, operand 0, single buffered']
    #allocation4 [shape = 's32[1]{0}', space=sflag, size = 0x4, scoped, tag = 'scoped memory for decoder_lstm_att_forward.1']
    #allocation5 [shape = 's32[1]{0}', space=sflag, size = 0x4, scoped, tag = 'scoped memory for decoder_lstm_att_forward.1']
    #allocation6 [shape = 's32[1]{0}', space=sflag, size = 0x4, scoped, tag = 'scoped memory for decoder_lstm_att_forward.1']
    #allocation7 [shape = 'u8[2048]{0}', space=vmem, size = 0x800, scoped, tag = 'input window, operand 7, single buffered']
    #allocation8 [shape = 'u8[512]{0}', space=vmem, size = 0x400, scoped, tag = 'input window, operand 9, single buffered']
    #allocation9 [shape = 's32[1]{0}', space=sflag, size = 0x4, scoped, tag = 'scoped memory for decoder_lstm_att_forward.1']
    #allocation10 [shape = 'u8[16384]{0}', space=vmem, size = 0x4000, scoped, tag = 'input window, operand 10, single buffered']
    #allocation11 [shape = 'u8[16384]{0}', space=vmem, size = 0x4000, scoped, tag = 'input window, operand 11, single buffered']
    #allocation12 [shape = 's32[1]{0}', space=sflag, size = 0x4, scoped, tag = 'scoped memory for decoder_lstm_att_forward.1']
    #allocation13 [shape = 'u8[16384]{0}', space=vmem, size = 0x4000, scoped, tag = 'input window, operand 12, single buffered']
    #allocation14 [shape = 'u8[512]{0}', space=vmem, size = 0x400, scoped, tag = 'input window, operand 13, single buffered']
    #allocation15 [shape = 's32[1]{0}', space=sflag, size = 0x4, scoped, tag = 'scoped memory for decoder_lstm_att_forward.1']
    #allocation16 [shape = 'u8[16384]{0}', space=vmem, size = 0x4000, scoped, tag = 'input window, operand 14, single buffered']
    #allocation17 [shape = 'u8[512]{0}', space=vmem, size = 0x400, scoped, tag = 'input window, operand 15, single buffered']
    #allocation18 [shape = 's32[1]{0}', space=sflag, size = 0x4, scoped, tag = 'scoped memory for decoder_lstm_att_forward.1']
    #allocation19 [shape = 'u8[4096]{0}', space=vmem, size = 0x1000, scoped, tag = 'output window, operand 0, single buffered']
    #allocation20 [shape = 'u8[4096]{0}', space=vmem, size = 0x1000, scoped, tag = 'output window, operand 1, single buffered']
    #allocation21 [shape = 's32[1]{0}', space=sflag, size = 0x4, scoped, tag = 'scoped memory for decoder_lstm_att_forward.1']
    #allocation22 [shape = 'u8[4096]{0}', space=vmem, size = 0x1000, scoped, tag = 'output window, operand 2, single buffered']
    %24 = vsyncpa [#allocation6], 0
    %25 = vsyncpa [#allocation4], 0
    %26 = vsyncpa [#allocation9], 0
    %27 = vsyncpa [#allocation12], 0
    %28 = vsyncpa [#allocation15], 0
    %29 = vsyncpa [#allocation18], 0
    %30 = vsyncpa [#allocation5], 0
    %31 = vsyncpa [#allocation21], 0
    // Predicated region
    $region2: #{decoder_lstm_att_forward.1} parent=1 // pred_check
      _
    $region3: #{decoder_lstm_att_forward.1} parent=1 // pred_check_branch
      %33 = sbr.rel (0) target = $region5
    $region4: #{decoder_lstm_att_forward.1} parent=1 // pred_region
      %s35 = ssub.s32 16, 16
      %36 = vsyncadd [#allocation6], %s35
      %s38 = sshll.u32 %s0, 4
      %s39 = int_to_ptr.vmem [resolvable:$true] %s38
      %41 = dma.vmem_to_smem %s39, 16, [#allocation3], [#allocation6]
    $region5: #{decoder_lstm_att_forward.1} parent=1 // pred_fallthru
      _
    // Predicated region
    $region6: #{decoder_lstm_att_forward.1} parent=1 // pred_check
      _
    $region7: #{decoder_lstm_att_forward.1} parent=1 // pred_check_branch
      %43 = sbr.rel (0) target = $region9
    $region8: #{decoder_lstm_att_forward.1} parent=1 // pred_region
      _
    $region9: #{decoder_lstm_att_forward.1} parent=1 // pred_fallthru
      _
    // Predicated region
    $region10: #{decoder_lstm_att_forward.1} parent=1 // pred_check
      _
    $region11: #{decoder_lstm_att_forward.1} parent=1 // pred_check_branch
      %45 = sbr.rel (0) target = $region13
    $region12: #{decoder_lstm_att_forward.1} parent=1 // pred_region
      _
    $region13: #{decoder_lstm_att_forward.1} parent=1 // pred_fallthru
      _
    // Predicated region
    $region14: #{decoder_lstm_att_forward.1} parent=1 // pred_check
      _
    $region15: #{decoder_lstm_att_forward.1} parent=1 // pred_check_branch
      %47 = sbr.rel (0) target = $region17
    $region16: #{decoder_lstm_att_forward.1} parent=1 // pred_region
      _
    $region17: #{decoder_lstm_att_forward.1} parent=1 // pred_fallthru
      _
    // Predicated region
    $region18: #{decoder_lstm_att_forward.1} parent=1 // pred_check
      _
    $region19: #{decoder_lstm_att_forward.1} parent=1 // pred_check_branch
      %49 = sbr.rel (0) target = $region21
    $region20: #{decoder_lstm_att_forward.1} parent=1 // pred_region
      _
    $region21: #{decoder_lstm_att_forward.1} parent=1 // pred_fallthru
      _
    // Predicated region
    $region22: #{decoder_lstm_att_forward.1} parent=1 // pred_check
      _
    $region23: #{decoder_lstm_att_forward.1} parent=1 // pred_check_branch
      %51 = sbr.rel (0) target = $region25
    $region24: #{decoder_lstm_att_forward.1} parent=1 // pred_region
      _
    $region25: #{decoder_lstm_att_forward.1} parent=1 // pred_fallthru
      _
    // Predicated region
    $region26: #{decoder_lstm_att_forward.1} parent=1 // pred_check
      _
    $region27: #{decoder_lstm_att_forward.1} parent=1 // pred_check_branch
      %53 = sbr.rel (0) target = $region29
    $region28: #{decoder_lstm_att_forward.1} parent=1 // pred_region
      _
    $region29: #{decoder_lstm_att_forward.1} parent=1 // pred_fallthru
      _
    // Predicated region
    $region30: #{decoder_lstm_att_forward.1} parent=1 // pred_check
      _
    $region31: #{decoder_lstm_att_forward.1} parent=1 // pred_check_branch
      %55 = sbr.rel (0) target = $region33
    $region32: #{decoder_lstm_att_forward.1} parent=1 // pred_region
      %s57 = ssub.s32 64, 64
      %58 = vsyncadd [#allocation4], %s57
      %s59 = sshll.u32 [#allocation7], 4
      %s60 = int_to_ptr.vmem [resolvable:$true] %s59
      %65 = dma.hbm_to_vmem [thread:$0]  %s7, 64, %s60, [#allocation4], 16, 16, 1
    $region33: #{decoder_lstm_att_forward.1} parent=1 // pred_fallthru
      _
    // Predicated region
    $region34: #{decoder_lstm_att_forward.1} parent=1 // pred_check
      _
    $region35: #{decoder_lstm_att_forward.1} parent=1 // pred_check_branch
      %67 = sbr.rel (0) target = $region37
    $region36: #{decoder_lstm_att_forward.1} parent=1 // pred_region
      _
    $region37: #{decoder_lstm_att_forward.1} parent=1 // pred_fallthru
      _
    // Predicated region
    $region38: #{decoder_lstm_att_forward.1} parent=1 // pred_check
      _
    $region39: #{decoder_lstm_att_forward.1} parent=1 // pred_check_branch
      %69 = sbr.rel (0) target = $region41
    $region40: #{decoder_lstm_att_forward.1} parent=1 // pred_region
      %s71 = ssub.s32 16, 16
      %72 = vsyncadd [#allocation9], %s71
      %s74 = sshll.u32 [#allocation8], 4
      %s75 = int_to_ptr.vmem [resolvable:$true] %s74
      %77 = dma.hbm_to_vmem [thread:$0]  %s9, 16, %s75, [#allocation9]
    $region41: #{decoder_lstm_att_forward.1} parent=1 // pred_fallthru
      _
    // Predicated region
    $region42: #{decoder_lstm_att_forward.1} parent=1 // pred_check
      _
    $region43: #{decoder_lstm_att_forward.1} parent=1 // pred_check_branch
      %79 = sbr.rel (0) target = $region45
    $region44: #{decoder_lstm_att_forward.1} parent=1 // pred_region
      %s81 = ssub.s32 512, 512
      %82 = vsyncadd [#allocation9], %s81
      %s83 = sshll.u32 [#allocation10], 4
      %s84 = int_to_ptr.vmem [resolvable:$true] %s83
      %89 = dma.hbm_to_vmem [thread:$0]  %s10, 512, %s84, [#allocation9], 128, 128, 8
    $region45: #{decoder_lstm_att_forward.1} parent=1 // pred_fallthru
      _
    // Predicated region
    $region46: #{decoder_lstm_att_forward.1} parent=1 // pred_check
      _
    $region47: #{decoder_lstm_att_forward.1} parent=1 // pred_check_branch
      %91 = sbr.rel (0) target = $region49
    $region48: #{decoder_lstm_att_forward.1} parent=1 // pred_region
      %s93 = ssub.s32 512, 512
      %94 = vsyncadd [#allocation12], %s93
      %s95 = sshll.u32 [#allocation11], 4
      %s96 = int_to_ptr.vmem [resolvable:$true] %s95
      %101 = dma.hbm_to_vmem [thread:$0]  %s11, 512, %s96, [#allocation12], 128, 128, 8
    $region49: #{decoder_lstm_att_forward.1} parent=1 // pred_fallthru
      _
    // Predicated region
    $region50: #{decoder_lstm_att_forward.1} parent=1 // pred_check
      _
    $region51: #{decoder_lstm_att_forward.1} parent=1 // pred_check_branch
      %103 = sbr.rel (0) target = $region53
    $region52: #{decoder_lstm_att_forward.1} parent=1 // pred_region
      %s105 = ssub.s32 512, 512
      %106 = vsyncadd [#allocation12], %s105
      %s107 = sshll.u32 [#allocation13], 4
      %s108 = int_to_ptr.vmem [resolvable:$true] %s107
      %113 = dma.hbm_to_vmem [thread:$0]  %s12, 512, %s108, [#allocation12], 128, 128, 8
    $region53: #{decoder_lstm_att_forward.1} parent=1 // pred_fallthru
      _
    // Predicated region
    $region54: #{decoder_lstm_att_forward.1} parent=1 // pred_check
      _
    $region55: #{decoder_lstm_att_forward.1} parent=1 // pred_check_branch
      %115 = sbr.rel (0) target = $region57
    $region56: #{decoder_lstm_att_forward.1} parent=1 // pred_region
      %s117 = ssub.s32 16, 16
      %118 = vsyncadd [#allocation15], %s117
      %s120 = sshll.u32 [#allocation14], 4
      %s121 = int_to_ptr.vmem [resolvable:$true] %s120
      %123 = dma.hbm_to_vmem [thread:$0]  %s13, 16, %s121, [#allocation15]
    $region57: #{decoder_lstm_att_forward.1} parent=1 // pred_fallthru
      _
    // Predicated region
    $region58: #{decoder_lstm_att_forward.1} parent=1 // pred_check
      _
    $region59: #{decoder_lstm_att_forward.1} parent=1 // pred_check_branch
      %125 = sbr.rel (0) target = $region61
    $region60: #{decoder_lstm_att_forward.1} parent=1 // pred_region
      %s127 = ssub.s32 512, 512
      %128 = vsyncadd [#allocation15], %s127
      %s129 = sshll.u32 [#allocation16], 4
      %s130 = int_to_ptr.vmem [resolvable:$true] %s129
      %135 = dma.hbm_to_vmem [thread:$0]  %s14, 512, %s130, [#allocation15], 128, 128, 8
    $region61: #{decoder_lstm_att_forward.1} parent=1 // pred_fallthru
      _
    // Predicated region
    $region62: #{decoder_lstm_att_forward.1} parent=1 // pred_check
      _
    $region63: #{decoder_lstm_att_forward.1} parent=1 // pred_check_branch
      %137 = sbr.rel (0) target = $region65
    $region64: #{decoder_lstm_att_forward.1} parent=1 // pred_region
      %s139 = ssub.s32 16, 16
      %140 = vsyncadd [#allocation18], %s139
      %s142 = sshll.u32 [#allocation17], 4
      %s143 = int_to_ptr.vmem [resolvable:$true] %s142
      %145 = dma.hbm_to_vmem [thread:$0]  %s15, 16, %s143, [#allocation18]
    $region65: #{decoder_lstm_att_forward.1} parent=1 // pred_fallthru
      _
    // Predicated region
    $region66: #{decoder_lstm_att_forward.1} parent=1 // pred_check
      _
    $region67: #{decoder_lstm_att_forward.1} parent=1 // pred_check_branch
      %147 = sbr.rel (0) target = $region69
    $region68: #{decoder_lstm_att_forward.1} parent=1 // pred_region
      %148 = dma.done [#allocation6], 16
    $region69: #{decoder_lstm_att_forward.1} parent=1 // pred_fallthru
      _
    // Predicated region
    $region70: #{decoder_lstm_att_forward.1} parent=1 // pred_check
      _
    $region71: #{decoder_lstm_att_forward.1} parent=1 // pred_check_branch
      %150 = sbr.rel (0) target = $region73
    $region72: #{decoder_lstm_att_forward.1} parent=1 // pred_region
      %151 = dma.done [#allocation4], 64
    $region73: #{decoder_lstm_att_forward.1} parent=1 // pred_fallthru
      _
    // Predicated region
    $region74: #{decoder_lstm_att_forward.1} parent=1 // pred_check
      _
    $region75: #{decoder_lstm_att_forward.1} parent=1 // pred_check_branch
      %153 = sbr.rel (0) target = $region77
    $region76: #{decoder_lstm_att_forward.1} parent=1 // pred_region
      %154 = dma.done [#allocation9], 16
    $region77: #{decoder_lstm_att_forward.1} parent=1 // pred_fallthru
      _
    // Predicated region
    $region78: #{decoder_lstm_att_forward.1} parent=1 // pred_check
      _
    $region79: #{decoder_lstm_att_forward.1} parent=1 // pred_check_branch
      %156 = sbr.rel (0) target = $region81
    $region80: #{decoder_lstm_att_forward.1} parent=1 // pred_region
      %157 = dma.done [#allocation9], 512
    $region81: #{decoder_lstm_att_forward.1} parent=1 // pred_fallthru
      _
    // Predicated region
    $region82: #{decoder_lstm_att_forward.1} parent=1 // pred_check
      _
    $region83: #{decoder_lstm_att_forward.1} parent=1 // pred_check_branch
      %159 = sbr.rel (0) target = $region85
    $region84: #{decoder_lstm_att_forward.1} parent=1 // pred_region
      %160 = dma.done [#allocation12], 512
    $region85: #{decoder_lstm_att_forward.1} parent=1 // pred_fallthru
      _
    // Predicated region
    $region86: #{decoder_lstm_att_forward.1} parent=1 // pred_check
      _
    $region87: #{decoder_lstm_att_forward.1} parent=1 // pred_check_branch
      %162 = sbr.rel (0) target = $region89
    $region88: #{decoder_lstm_att_forward.1} parent=1 // pred_region
      %163 = dma.done [#allocation12], 512
    $region89: #{decoder_lstm_att_forward.1} parent=1 // pred_fallthru
      _
    // Predicated region
    $region90: #{decoder_lstm_att_forward.1} parent=1 // pred_check
      _
    $region91: #{decoder_lstm_att_forward.1} parent=1 // pred_check_branch
      %165 = sbr.rel (0) target = $region93
    $region92: #{decoder_lstm_att_forward.1} parent=1 // pred_region
      %166 = dma.done [#allocation15], 16
    $region93: #{decoder_lstm_att_forward.1} parent=1 // pred_fallthru
      _
    // Predicated region
    $region94: #{decoder_lstm_att_forward.1} parent=1 // pred_check
      _
    $region95: #{decoder_lstm_att_forward.1} parent=1 // pred_check_branch
      %168 = sbr.rel (0) target = $region97
    $region96: #{decoder_lstm_att_forward.1} parent=1 // pred_region
      %169 = dma.done [#allocation15], 512
    $region97: #{decoder_lstm_att_forward.1} parent=1 // pred_fallthru
      _
    // Predicated region
    $region98: #{decoder_lstm_att_forward.1} parent=1 // pred_check
      _
    $region99: #{decoder_lstm_att_forward.1} parent=1 // pred_check_branch
      %171 = sbr.rel (0) target = $region101
    $region100: #{decoder_lstm_att_forward.1} parent=1 // pred_region
      %172 = dma.done [#allocation18], 16
    $region101: #{decoder_lstm_att_forward.1} parent=1 // pred_fallthru
      _
    %173 = sfence
    %s174 = sld [smem:[#allocation3]]
    %s175 = scalar_lea.vmem %s1, %s174
    %v176 = vld [vmem:[%s175] sm:$0x1]
    %vm177 = vcmask 253952
    %178 = vst.msk [vmem:[#allocation2] sm:$0x1] %vm177, %v176
    %s179 = sld [smem:[#allocation3 + $0x1]]
    %s180 = scalar_lea.vmem %s1, %s179
    %v181 = vld [vmem:[%s180] sm:$0x1]
    %182 = vst.msk [vmem:[#allocation2 + $0x1] sm:$0x1] %vm177, %v181
    %s183 = sld [smem:[#allocation3 + $0x2]]
    %s184 = scalar_lea.vmem %s1, %s183
    %v185 = vld [vmem:[%s184] sm:$0x1]
    %186 = vst.msk [vmem:[#allocation2 + $0x2] sm:$0x1] %vm177, %v185
    %s187 = sld [smem:[#allocation3 + $0x3]]
    %s188 = scalar_lea.vmem %s1, %s187
    %v189 = vld [vmem:[%s188] sm:$0x1]
    %190 = vst.msk [vmem:[#allocation2 + $0x3] sm:$0x1] %vm177, %v189
    %s191 = sld [smem:[#allocation3 + $0x4]]
    %s192 = scalar_lea.vmem %s1, %s191
    %v193 = vld [vmem:[%s192] sm:$0x1]
    %194 = vst.msk [vmem:[#allocation2 + $0x4] sm:$0x1] %vm177, %v193
    %s195 = sld [smem:[#allocation3 + $0x5]]
    %s196 = scalar_lea.vmem %s1, %s195
    %v197 = vld [vmem:[%s196] sm:$0x1]
    %198 = vst.msk [vmem:[#allocation2 + $0x5] sm:$0x1] %vm177, %v197
    %s199 = sld [smem:[#allocation3 + $0x6]]
    %s200 = scalar_lea.vmem %s1, %s199
    %v201 = vld [vmem:[%s200] sm:$0x1]
    %202 = vst.msk [vmem:[#allocation2 + $0x6] sm:$0x1] %vm177, %v201
    %s203 = sld [smem:[#allocation3 + $0x7]]
    %s204 = scalar_lea.vmem %s1, %s203
    %v205 = vld [vmem:[%s204] sm:$0x1]
    %206 = vst.msk [vmem:[#allocation2 + $0x7] sm:$0x1] %vm177, %v205
    %v207 = vld [vmem:[#allocation2] sm:$0xff]
    %v208 = vld [vmem:[%s3] sm:$0xff]
    %v209 = vld [vmem:[%s4] sm:$0xff]
    %v210 = vld [vmem:[%s5] sm:$0xff]
    %v211 = vld [vmem:[%s5 + $0x8] sm:$0xff]
    %v212 = vld [vmem:[%s5 + $0x10] sm:$0xff]
    %v213 = vld [vmem:[%s5 + $0x18] sm:$0xff]
    %v214 = vld [vmem:[%s6] sm:$0xff]
    %v215 = vld [vmem:[%s6 + $0x8] sm:$0xff]
    %v216 = vld [vmem:[%s6 + $0x10] sm:$0xff]
    %v217 = vld [vmem:[%s6 + $0x18] sm:$0xff]
    %vm218 = vcmask 261120
    %v220 = vsel %vm218, %v208, 0
    %222 = vmatprep.subr.mxu0 0.0
    %223 = vmatpush1.msra.mxu0 %v214
    %224 = vmatprep.subr.mxu0 0.0
    %225 = vmatpush1.msra.mxu0 %v215
    %226 = vmatprep.subr.mxu0 0.0
    %227 = vmatpush1.msra.mxu0 %v216
    %228 = vmatprep.subr.mxu0 0.0
    %229 = vmatpush1.msra.mxu0 %v217
    %230 = vmatprep.subr.mxu0 0.0
    %231 = vmatpush1.msra.mxu0 0.0
    %232 = vmatprep.subr.mxu0 0.0
    %233 = vmatpush1.msra.mxu0 0.0
    %234 = vmatprep.subr.mxu0 0.0
    %235 = vmatpush1.msra.mxu0 0.0
    %236 = vmatprep.subr.mxu0 0.0
    %237 = vmatpush1.msra.mxu0 0.0
    %238 = vmatprep.subr.mxu0 0.0
    %239 = vmatpush1.msra.mxu0 0.0
    %240 = vmatprep.subr.mxu0 0.0
    %241 = vmatpush1.msra.mxu0 0.0
    %242 = vmatprep.subr.mxu0 0.0
    %243 = vmatpush1.msra.mxu0 0.0
    %244 = vmatprep.subr.mxu0 0.0
    %245 = vmatpush1.msra.mxu0 0.0
    %246 = vmatprep.subr.mxu0 0.0
    %247 = vmatpush1.msra.mxu0 0.0
    %248 = vmatprep.subr.mxu0 0.0
    %249 = vmatpush1.msra.mxu0 0.0
    %250 = vmatprep.subr.mxu0 0.0
    %251 = vmatpush1.msra.mxu0 0.0
    %252 = vmatprep.subr.mxu0 0.0
    %253 = vmatpush1.msra.mxu0 0.0
    %254 = vmatprep.subr.mxu0 0.0
    %255 = vmatpush1.msra.mxu0 0.0
    %256 = vmatprep.subr.mxu0 0.0
    %257 = vmatpush1.msra.mxu0 0.0
    %258 = vmatprep.subr.mxu0 0.0
    %259 = vmatpush1.msra.mxu0 0.0
    %260 = vmatprep.subr.mxu0 0.0
    %261 = vmatpush1.msra.mxu0 0.0
    %262 = vmatprep.subr.mxu0 0.0
    %263 = vmatpush1.msra.mxu0 0.0
    %264 = vmatprep.subr.mxu0 0.0
    %265 = vmatpush1.msra.mxu0 0.0
    %266 = vmatprep.subr.mxu0 0.0
    %267 = vmatpush1.msra.mxu0 0.0
    %268 = vmatprep.subr.mxu0 0.0
    %269 = vmatpush1.msra.mxu0 0.0
    %270 = vmatprep.subr.mxu0 0.0
    %271 = vmatpush1.msra.mxu0 0.0
    %272 = vmatprep.subr.mxu0 0.0
    %273 = vmatpush1.msra.mxu0 0.0
    %274 = vmatprep.subr.mxu0 0.0
    %275 = vmatpush1.msra.mxu0 0.0
    %276 = vmatprep.subr.mxu0 0.0
    %277 = vmatpush1.msra.mxu0 0.0
    %278 = vmatprep.subr.mxu0 0.0
    %279 = vmatpush1.msra.mxu0 0.0
    %280 = vmatprep.subr.mxu0 0.0
    %281 = vmatpush1.msra.mxu0 0.0
    %282 = vmatprep.subr.mxu0 0.0
    %283 = vmatpush1.msra.mxu0 0.0
    %284 = vmatprep.subr.mxu0 0.0
    %285 = vmatpush1.msra.mxu0 0.0
    %286 = vmatprep.mubr.f32.mxu0 0.0
    %287 = vmatmul.mubr.f32.gmra.mrb[0].mxu0 %v220
    %v288 = vpop.f32.mrb[0].mxu0
    %v289 = vadd.f32 0.0, %v288
    %v290 = vpop.f32.mrb[0].mxu0
    %291 = vdwg.mxu0
    %v293 = vsel %vm218, %v207, 0
    %295 = vmatprep.subr.mxu0 0.0
    %296 = vmatpush1.msra.mxu0 %v210
    %297 = vmatprep.subr.mxu0 0.0
    %298 = vmatpush1.msra.mxu0 %v211
    %299 = vmatprep.subr.mxu0 0.0
    %300 = vmatpush1.msra.mxu0 %v212
    %301 = vmatprep.subr.mxu0 0.0
    %302 = vmatpush1.msra.mxu0 %v213
    %303 = vmatprep.subr.mxu0 0.0
    %304 = vmatpush1.msra.mxu0 0.0
    %305 = vmatprep.subr.mxu0 0.0
    %306 = vmatpush1.msra.mxu0 0.0
    %307 = vmatprep.subr.mxu0 0.0
    %308 = vmatpush1.msra.mxu0 0.0
    %309 = vmatprep.subr.mxu0 0.0
    %310 = vmatpush1.msra.mxu0 0.0
    %311 = vmatprep.subr.mxu0 0.0
    %312 = vmatpush1.msra.mxu0 0.0
    %313 = vmatprep.subr.mxu0 0.0
    %314 = vmatpush1.msra.mxu0 0.0
    %315 = vmatprep.subr.mxu0 0.0
    %316 = vmatpush1.msra.mxu0 0.0
    %317 = vmatprep.subr.mxu0 0.0
    %318 = vmatpush1.msra.mxu0 0.0
    %319 = vmatprep.subr.mxu0 0.0
    %320 = vmatpush1.msra.mxu0 0.0
    %321 = vmatprep.subr.mxu0 0.0
    %322 = vmatpush1.msra.mxu0 0.0
    %323 = vmatprep.subr.mxu0 0.0
    %324 = vmatpush1.msra.mxu0 0.0
    %325 = vmatprep.subr.mxu0 0.0
    %326 = vmatpush1.msra.mxu0 0.0
    %327 = vmatprep.subr.mxu0 0.0
    %328 = vmatpush1.msra.mxu0 0.0
    %329 = vmatprep.subr.mxu0 0.0
    %330 = vmatpush1.msra.mxu0 0.0
    %331 = vmatprep.subr.mxu0 0.0
    %332 = vmatpush1.msra.mxu0 0.0
    %333 = vmatprep.subr.mxu0 0.0
    %334 = vmatpush1.msra.mxu0 0.0
    %335 = vmatprep.subr.mxu0 0.0
    %336 = vmatpush1.msra.mxu0 0.0
    %337 = vmatprep.subr.mxu0 0.0
    %338 = vmatpush1.msra.mxu0 0.0
    %339 = vmatprep.subr.mxu0 0.0
    %340 = vmatpush1.msra.mxu0 0.0
    %341 = vmatprep.subr.mxu0 0.0
    %342 = vmatpush1.msra.mxu0 0.0
    %343 = vmatprep.subr.mxu0 0.0
    %344 = vmatpush1.msra.mxu0 0.0
    %345 = vmatprep.subr.mxu0 0.0
    %346 = vmatpush1.msra.mxu0 0.0
    %347 = vmatprep.subr.mxu0 0.0
    %348 = vmatpush1.msra.mxu0 0.0
    %349 = vmatprep.subr.mxu0 0.0
    %350 = vmatpush1.msra.mxu0 0.0
    %351 = vmatprep.subr.mxu0 0.0
    %352 = vmatpush1.msra.mxu0 0.0
    %353 = vmatprep.subr.mxu0 0.0
    %354 = vmatpush1.msra.mxu0 0.0
    %355 = vmatprep.subr.mxu0 0.0
    %356 = vmatpush1.msra.mxu0 0.0
    %357 = vmatprep.subr.mxu0 0.0
    %358 = vmatpush1.msra.mxu0 0.0
    %359 = vmatprep.mubr.f32.mxu0 0.0
    %360 = vmatmul.mubr.f32.gmra.mrb[0].mxu0 %v293
    %v361 = vpop.f32.mrb[0].mxu0
    %v362 = vadd.f32 %v289, %v361
    %v363 = vpop.f32.mrb[0].mxu0
    %364 = vdwg.mxu0
    %v365 = vld [vmem:[#allocation7] sm:$0x1]
    %v367 = vlaneseq
    %v368 = vshrl.u32 %v367, 7
    %v369 = vsub.s32 0, %v368
    %v370 = vrot.slane %v365, %v369
    %v372 = vadd.f32 %v362, %v370
    %v373 = vxor.u32 %v372, 2147483648
    %v374 = vmul.f32 %v373, 1.442695
    %v375 = vpow.pop %v374
    %v376 = vadd.f32 %v375, 1.0
    %v377 = vrcp.pop %v376
    %v378 = vmul.f32 1.0, %v377
    %s379 = scalar_lea.vmem %s5, 32
    %v380 = vld [vmem:[%s379] sm:$0xff]
    %v381 = vld [vmem:[%s379 + $0x8] sm:$0xff]
    %v382 = vld [vmem:[%s379 + $0x10] sm:$0xff]
    %v383 = vld [vmem:[%s379 + $0x18] sm:$0xff]
    %s384 = scalar_lea.vmem %s6, 32
    %v385 = vld [vmem:[%s384] sm:$0xff]
    %v386 = vld [vmem:[%s384 + $0x8] sm:$0xff]
    %v387 = vld [vmem:[%s384 + $0x10] sm:$0xff]
    %v388 = vld [vmem:[%s384 + $0x18] sm:$0xff]
    %389 = vmatprep.subr.mxu0 0.0
    %390 = vmatpush1.msra.mxu0 %v385
    %391 = vmatprep.subr.mxu0 0.0
    %392 = vmatpush1.msra.mxu0 %v386
    %393 = vmatprep.subr.mxu0 0.0
    %394 = vmatpush1.msra.mxu0 %v387
    %395 = vmatprep.subr.mxu0 0.0
    %396 = vmatpush1.msra.mxu0 %v388
    %397 = vmatprep.subr.mxu0 0.0
    %398 = vmatpush1.msra.mxu0 0.0
    %399 = vmatprep.subr.mxu0 0.0
    %400 = vmatpush1.msra.mxu0 0.0
    %401 = vmatprep.subr.mxu0 0.0
    %402 = vmatpush1.msra.mxu0 0.0
    %403 = vmatprep.subr.mxu0 0.0
    %404 = vmatpush1.msra.mxu0 0.0
    %405 = vmatprep.subr.mxu0 0.0
    %406 = vmatpush1.msra.mxu0 0.0
    %407 = vmatprep.subr.mxu0 0.0
    %408 = vmatpush1.msra.mxu0 0.0
    %409 = vmatprep.subr.mxu0 0.0
    %410 = vmatpush1.msra.mxu0 0.0
    %411 = vmatprep.subr.mxu0 0.0
    %412 = vmatpush1.msra.mxu0 0.0
    %413 = vmatprep.subr.mxu0 0.0
    %414 = vmatpush1.msra.mxu0 0.0
    %415 = vmatprep.subr.mxu0 0.0
    %416 = vmatpush1.msra.mxu0 0.0
    %417 = vmatprep.subr.mxu0 0.0
    %418 = vmatpush1.msra.mxu0 0.0
    %419 = vmatprep.subr.mxu0 0.0
    %420 = vmatpush1.msra.mxu0 0.0
    %421 = vmatprep.subr.mxu0 0.0
    %422 = vmatpush1.msra.mxu0 0.0
    %423 = vmatprep.subr.mxu0 0.0
    %424 = vmatpush1.msra.mxu0 0.0
    %425 = vmatprep.subr.mxu0 0.0
    %426 = vmatpush1.msra.mxu0 0.0
    %427 = vmatprep.subr.mxu0 0.0
    %428 = vmatpush1.msra.mxu0 0.0
    %429 = vmatprep.subr.mxu0 0.0
    %430 = vmatpush1.msra.mxu0 0.0
    %431 = vmatprep.subr.mxu0 0.0
    %432 = vmatpush1.msra.mxu0 0.0
    %433 = vmatprep.subr.mxu0 0.0
    %434 = vmatpush1.msra.mxu0 0.0
    %435 = vmatprep.subr.mxu0 0.0
    %436 = vmatpush1.msra.mxu0 0.0
    %437 = vmatprep.subr.mxu0 0.0
    %438 = vmatpush1.msra.mxu0 0.0
    %439 = vmatprep.subr.mxu0 0.0
    %440 = vmatpush1.msra.mxu0 0.0
    %441 = vmatprep.subr.mxu0 0.0
    %442 = vmatpush1.msra.mxu0 0.0
    %443 = vmatprep.subr.mxu0 0.0
    %444 = vmatpush1.msra.mxu0 0.0
    %445 = vmatprep.subr.mxu0 0.0
    %446 = vmatpush1.msra.mxu0 0.0
    %447 = vmatprep.subr.mxu0 0.0
    %448 = vmatpush1.msra.mxu0 0.0
    %449 = vmatprep.subr.mxu0 0.0
    %450 = vmatpush1.msra.mxu0 0.0
    %451 = vmatprep.subr.mxu0 0.0
    %452 = vmatpush1.msra.mxu0 0.0
    %453 = vmatprep.mubr.f32.mxu0 0.0
    %454 = vmatmul.mubr.f32.gmra.mrb[0].mxu0 %v220
    %v455 = vpop.f32.mrb[0].mxu0
    %v456 = vadd.f32 0.0, %v455
    %v457 = vpop.f32.mrb[0].mxu0
    %458 = vdwg.mxu0
    %459 = vmatprep.subr.mxu0 0.0
    %460 = vmatpush1.msra.mxu0 %v380
    %461 = vmatprep.subr.mxu0 0.0
    %462 = vmatpush1.msra.mxu0 %v381
    %463 = vmatprep.subr.mxu0 0.0
    %464 = vmatpush1.msra.mxu0 %v382
    %465 = vmatprep.subr.mxu0 0.0
    %466 = vmatpush1.msra.mxu0 %v383
    %467 = vmatprep.subr.mxu0 0.0
    %468 = vmatpush1.msra.mxu0 0.0
    %469 = vmatprep.subr.mxu0 0.0
    %470 = vmatpush1.msra.mxu0 0.0
    %471 = vmatprep.subr.mxu0 0.0
    %472 = vmatpush1.msra.mxu0 0.0
    %473 = vmatprep.subr.mxu0 0.0
    %474 = vmatpush1.msra.mxu0 0.0
    %475 = vmatprep.subr.mxu0 0.0
    %476 = vmatpush1.msra.mxu0 0.0
    %477 = vmatprep.subr.mxu0 0.0
    %478 = vmatpush1.msra.mxu0 0.0
    %479 = vmatprep.subr.mxu0 0.0
    %480 = vmatpush1.msra.mxu0 0.0
    %481 = vmatprep.subr.mxu0 0.0
    %482 = vmatpush1.msra.mxu0 0.0
    %483 = vmatprep.subr.mxu0 0.0
    %484 = vmatpush1.msra.mxu0 0.0
    %485 = vmatprep.subr.mxu0 0.0
    %486 = vmatpush1.msra.mxu0 0.0
    %487 = vmatprep.subr.mxu0 0.0
    %488 = vmatpush1.msra.mxu0 0.0
    %489 = vmatprep.subr.mxu0 0.0
    %490 = vmatpush1.msra.mxu0 0.0
    %491 = vmatprep.subr.mxu0 0.0
    %492 = vmatpush1.msra.mxu0 0.0
    %493 = vmatprep.subr.mxu0 0.0
    %494 = vmatpush1.msra.mxu0 0.0
    %495 = vmatprep.subr.mxu0 0.0
    %496 = vmatpush1.msra.mxu0 0.0
    %497 = vmatprep.subr.mxu0 0.0
    %498 = vmatpush1.msra.mxu0 0.0
    %499 = vmatprep.subr.mxu0 0.0
    %500 = vmatpush1.msra.mxu0 0.0
    %501 = vmatprep.subr.mxu0 0.0
    %502 = vmatpush1.msra.mxu0 0.0
    %503 = vmatprep.subr.mxu0 0.0
    %504 = vmatpush1.msra.mxu0 0.0
    %505 = vmatprep.subr.mxu0 0.0
    %506 = vmatpush1.msra.mxu0 0.0
    %507 = vmatprep.subr.mxu0 0.0
    %508 = vmatpush1.msra.mxu0 0.0
    %509 = vmatprep.subr.mxu0 0.0
    %510 = vmatpush1.msra.mxu0 0.0
    %511 = vmatprep.subr.mxu0 0.0
    %512 = vmatpush1.msra.mxu0 0.0
    %513 = vmatprep.subr.mxu0 0.0
    %514 = vmatpush1.msra.mxu0 0.0
    %515 = vmatprep.subr.mxu0 0.0
    %516 = vmatpush1.msra.mxu0 0.0
    %517 = vmatprep.subr.mxu0 0.0
    %518 = vmatpush1.msra.mxu0 0.0
    %519 = vmatprep.subr.mxu0 0.0
    %520 = vmatpush1.msra.mxu0 0.0
    %521 = vmatprep.subr.mxu0 0.0
    %522 = vmatpush1.msra.mxu0 0.0
    %523 = vmatprep.mubr.f32.mxu0 0.0
    %524 = vmatmul.mubr.f32.gmra.mrb[0].mxu0 %v293
    %v525 = vpop.f32.mrb[0].mxu0
    %v526 = vadd.f32 %v456, %v525
    %v527 = vpop.f32.mrb[0].mxu0
    %528 = vdwg.mxu0
    %s529 = scalar_lea.vmem [#allocation7], 1
    %v530 = vld [vmem:[%s529] sm:$0x1]
    %v532 = vlaneseq
    %v533 = vshrl.u32 %v532, 7
    %v534 = vsub.s32 0, %v533
    %v535 = vrot.slane %v530, %v534
    %v537 = vadd.f32 %v526, %v535
    %v538 = vxor.u32 %v537, 2147483648
    %v539 = vmul.f32 %v538, 1.442695
    %v540 = vpow.pop %v539
    %v541 = vadd.f32 %v540, 1.0
    %v542 = vrcp.pop %v541
    %v543 = vmul.f32 1.0, %v542
    %s544 = scalar_lea.vmem %s5, 64
    %v545 = vld [vmem:[%s544] sm:$0xff]
    %v546 = vld [vmem:[%s544 + $0x8] sm:$0xff]
    %v547 = vld [vmem:[%s544 + $0x10] sm:$0xff]
    %v548 = vld [vmem:[%s544 + $0x18] sm:$0xff]
    %s549 = scalar_lea.vmem %s6, 64
    %v550 = vld [vmem:[%s549] sm:$0xff]
    %v551 = vld [vmem:[%s549 + $0x8] sm:$0xff]
    %v552 = vld [vmem:[%s549 + $0x10] sm:$0xff]
    %v553 = vld [vmem:[%s549 + $0x18] sm:$0xff]
    %554 = vmatprep.subr.mxu0 0.0
    %555 = vmatpush1.msra.mxu0 %v550
    %556 = vmatprep.subr.mxu0 0.0
    %557 = vmatpush1.msra.mxu0 %v551
    %558 = vmatprep.subr.mxu0 0.0
    %559 = vmatpush1.msra.mxu0 %v552
    %560 = vmatprep.subr.mxu0 0.0
    %561 = vmatpush1.msra.mxu0 %v553
    %562 = vmatprep.subr.mxu0 0.0
    %563 = vmatpush1.msra.mxu0 0.0
    %564 = vmatprep.subr.mxu0 0.0
    %565 = vmatpush1.msra.mxu0 0.0
    %566 = vmatprep.subr.mxu0 0.0
    %567 = vmatpush1.msra.mxu0 0.0
    %568 = vmatprep.subr.mxu0 0.0
    %569 = vmatpush1.msra.mxu0 0.0
    %570 = vmatprep.subr.mxu0 0.0
    %571 = vmatpush1.msra.mxu0 0.0
    %572 = vmatprep.subr.mxu0 0.0
    %573 = vmatpush1.msra.mxu0 0.0
    %574 = vmatprep.subr.mxu0 0.0
    %575 = vmatpush1.msra.mxu0 0.0
    %576 = vmatprep.subr.mxu0 0.0
    %577 = vmatpush1.msra.mxu0 0.0
    %578 = vmatprep.subr.mxu0 0.0
    %579 = vmatpush1.msra.mxu0 0.0
    %580 = vmatprep.subr.mxu0 0.0
    %581 = vmatpush1.msra.mxu0 0.0
    %582 = vmatprep.subr.mxu0 0.0
    %583 = vmatpush1.msra.mxu0 0.0
    %584 = vmatprep.subr.mxu0 0.0
    %585 = vmatpush1.msra.mxu0 0.0
    %586 = vmatprep.subr.mxu0 0.0
    %587 = vmatpush1.msra.mxu0 0.0
    %588 = vmatprep.subr.mxu0 0.0
    %589 = vmatpush1.msra.mxu0 0.0
    %590 = vmatprep.subr.mxu0 0.0
    %591 = vmatpush1.msra.mxu0 0.0
    %592 = vmatprep.subr.mxu0 0.0
    %593 = vmatpush1.msra.mxu0 0.0
    %594 = vmatprep.subr.mxu0 0.0
    %595 = vmatpush1.msra.mxu0 0.0
    %596 = vmatprep.subr.mxu0 0.0
    %597 = vmatpush1.msra.mxu0 0.0
    %598 = vmatprep.subr.mxu0 0.0
    %599 = vmatpush1.msra.mxu0 0.0
    %600 = vmatprep.subr.mxu0 0.0
    %601 = vmatpush1.msra.mxu0 0.0
    %602 = vmatprep.subr.mxu0 0.0
    %603 = vmatpush1.msra.mxu0 0.0
    %604 = vmatprep.subr.mxu0 0.0
    %605 = vmatpush1.msra.mxu0 0.0
    %606 = vmatprep.subr.mxu0 0.0
    %607 = vmatpush1.msra.mxu0 0.0
    %608 = vmatprep.subr.mxu0 0.0
    %609 = vmatpush1.msra.mxu0 0.0
    %610 = vmatprep.subr.mxu0 0.0
    %611 = vmatpush1.msra.mxu0 0.0
    %612 = vmatprep.subr.mxu0 0.0
    %613 = vmatpush1.msra.mxu0 0.0
    %614 = vmatprep.subr.mxu0 0.0
    %615 = vmatpush1.msra.mxu0 0.0
    %616 = vmatprep.subr.mxu0 0.0
    %617 = vmatpush1.msra.mxu0 0.0
    %618 = vmatprep.mubr.f32.mxu0 0.0
    %619 = vmatmul.mubr.f32.gmra.mrb[0].mxu0 %v220
    %v620 = vpop.f32.mrb[0].mxu0
    %v621 = vadd.f32 0.0, %v620
    %v622 = vpop.f32.mrb[0].mxu0
    %623 = vdwg.mxu0
    %624 = vmatprep.subr.mxu0 0.0
    %625 = vmatpush1.msra.mxu0 %v545
    %626 = vmatprep.subr.mxu0 0.0
    %627 = vmatpush1.msra.mxu0 %v546
    %628 = vmatprep.subr.mxu0 0.0
    %629 = vmatpush1.msra.mxu0 %v547
    %630 = vmatprep.subr.mxu0 0.0
    %631 = vmatpush1.msra.mxu0 %v548
    %632 = vmatprep.subr.mxu0 0.0
    %633 = vmatpush1.msra.mxu0 0.0
    %634 = vmatprep.subr.mxu0 0.0
    %635 = vmatpush1.msra.mxu0 0.0
    %636 = vmatprep.subr.mxu0 0.0
    %637 = vmatpush1.msra.mxu0 0.0
    %638 = vmatprep.subr.mxu0 0.0
    %639 = vmatpush1.msra.mxu0 0.0
    %640 = vmatprep.subr.mxu0 0.0
    %641 = vmatpush1.msra.mxu0 0.0
    %642 = vmatprep.subr.mxu0 0.0
    %643 = vmatpush1.msra.mxu0 0.0
    %644 = vmatprep.subr.mxu0 0.0
    %645 = vmatpush1.msra.mxu0 0.0
    %646 = vmatprep.subr.mxu0 0.0
    %647 = vmatpush1.msra.mxu0 0.0
    %648 = vmatprep.subr.mxu0 0.0
    %649 = vmatpush1.msra.mxu0 0.0
    %650 = vmatprep.subr.mxu0 0.0
    %651 = vmatpush1.msra.mxu0 0.0
    %652 = vmatprep.subr.mxu0 0.0
    %653 = vmatpush1.msra.mxu0 0.0
    %654 = vmatprep.subr.mxu0 0.0
    %655 = vmatpush1.msra.mxu0 0.0
    %656 = vmatprep.subr.mxu0 0.0
    %657 = vmatpush1.msra.mxu0 0.0
    %658 = vmatprep.subr.mxu0 0.0
    %659 = vmatpush1.msra.mxu0 0.0
    %660 = vmatprep.subr.mxu0 0.0
    %661 = vmatpush1.msra.mxu0 0.0
    %662 = vmatprep.subr.mxu0 0.0
    %663 = vmatpush1.msra.mxu0 0.0
    %664 = vmatprep.subr.mxu0 0.0
    %665 = vmatpush1.msra.mxu0 0.0
    %666 = vmatprep.subr.mxu0 0.0
    %667 = vmatpush1.msra.mxu0 0.0
    %668 = vmatprep.subr.mxu0 0.0
    %669 = vmatpush1.msra.mxu0 0.0
    %670 = vmatprep.subr.mxu0 0.0
    %671 = vmatpush1.msra.mxu0 0.0
    %672 = vmatprep.subr.mxu0 0.0
    %673 = vmatpush1.msra.mxu0 0.0
    %674 = vmatprep.subr.mxu0 0.0
    %675 = vmatpush1.msra.mxu0 0.0
    %676 = vmatprep.subr.mxu0 0.0
    %677 = vmatpush1.msra.mxu0 0.0
    %678 = vmatprep.subr.mxu0 0.0
    %679 = vmatpush1.msra.mxu0 0.0
    %680 = vmatprep.subr.mxu0 0.0
    %681 = vmatpush1.msra.mxu0 0.0
    %682 = vmatprep.subr.mxu0 0.0
    %683 = vmatpush1.msra.mxu0 0.0
    %684 = vmatprep.subr.mxu0 0.0
    %685 = vmatpush1.msra.mxu0 0.0
    %686 = vmatprep.subr.mxu0 0.0
    %687 = vmatpush1.msra.mxu0 0.0
    %688 = vmatprep.mubr.f32.mxu0 0.0
    %689 = vmatmul.mubr.f32.gmra.mrb[0].mxu0 %v293
    %v690 = vpop.f32.mrb[0].mxu0
    %v691 = vadd.f32 %v621, %v690
    %v692 = vpop.f32.mrb[0].mxu0
    %693 = vdwg.mxu0
    %s694 = scalar_lea.vmem [#allocation7], 2
    %v695 = vld [vmem:[%s694] sm:$0x1]
    %v697 = vlaneseq
    %v698 = vshrl.u32 %v697, 7
    %v699 = vsub.s32 0, %v698
    %v700 = vrot.slane %v695, %v699
    %v702 = vadd.f32 %v691, %v700
    %v703 = vtanh.pop %v702
    %s704 = scalar_lea.vmem %s5, 96
    %v705 = vld [vmem:[%s704] sm:$0xff]
    %v706 = vld [vmem:[%s704 + $0x8] sm:$0xff]
    %v707 = vld [vmem:[%s704 + $0x10] sm:$0xff]
    %v708 = vld [vmem:[%s704 + $0x18] sm:$0xff]
    %s709 = scalar_lea.vmem %s6, 96
    %v710 = vld [vmem:[%s709] sm:$0xff]
    %v711 = vld [vmem:[%s709 + $0x8] sm:$0xff]
    %v712 = vld [vmem:[%s709 + $0x10] sm:$0xff]
    %v713 = vld [vmem:[%s709 + $0x18] sm:$0xff]
    %714 = vmatprep.subr.mxu0 0.0
    %715 = vmatpush1.msra.mxu0 %v710
    %716 = vmatprep.subr.mxu0 0.0
    %717 = vmatpush1.msra.mxu0 %v711
    %718 = vmatprep.subr.mxu0 0.0
    %719 = vmatpush1.msra.mxu0 %v712
    %720 = vmatprep.subr.mxu0 0.0
    %721 = vmatpush1.msra.mxu0 %v713
    %722 = vmatprep.subr.mxu0 0.0
    %723 = vmatpush1.msra.mxu0 0.0
    %724 = vmatprep.subr.mxu0 0.0
    %725 = vmatpush1.msra.mxu0 0.0
    %726 = vmatprep.subr.mxu0 0.0
    %727 = vmatpush1.msra.mxu0 0.0
    %728 = vmatprep.subr.mxu0 0.0
    %729 = vmatpush1.msra.mxu0 0.0
    %730 = vmatprep.subr.mxu0 0.0
    %731 = vmatpush1.msra.mxu0 0.0
    %732 = vmatprep.subr.mxu0 0.0
    %733 = vmatpush1.msra.mxu0 0.0
    %734 = vmatprep.subr.mxu0 0.0
    %735 = vmatpush1.msra.mxu0 0.0
    %736 = vmatprep.subr.mxu0 0.0
    %737 = vmatpush1.msra.mxu0 0.0
    %738 = vmatprep.subr.mxu0 0.0
    %739 = vmatpush1.msra.mxu0 0.0
    %740 = vmatprep.subr.mxu0 0.0
    %741 = vmatpush1.msra.mxu0 0.0
    %742 = vmatprep.subr.mxu0 0.0
    %743 = vmatpush1.msra.mxu0 0.0
    %744 = vmatprep.subr.mxu0 0.0
    %745 = vmatpush1.msra.mxu0 0.0
    %746 = vmatprep.subr.mxu0 0.0
    %747 = vmatpush1.msra.mxu0 0.0
    %748 = vmatprep.subr.mxu0 0.0
    %749 = vmatpush1.msra.mxu0 0.0
    %750 = vmatprep.subr.mxu0 0.0
    %751 = vmatpush1.msra.mxu0 0.0
    %752 = vmatprep.subr.mxu0 0.0
    %753 = vmatpush1.msra.mxu0 0.0
    %754 = vmatprep.subr.mxu0 0.0
    %755 = vmatpush1.msra.mxu0 0.0
    %756 = vmatprep.subr.mxu0 0.0
    %757 = vmatpush1.msra.mxu0 0.0
    %758 = vmatprep.subr.mxu0 0.0
    %759 = vmatpush1.msra.mxu0 0.0
    %760 = vmatprep.subr.mxu0 0.0
    %761 = vmatpush1.msra.mxu0 0.0
    %762 = vmatprep.subr.mxu0 0.0
    %763 = vmatpush1.msra.mxu0 0.0
    %764 = vmatprep.subr.mxu0 0.0
    %765 = vmatpush1.msra.mxu0 0.0
    %766 = vmatprep.subr.mxu0 0.0
    %767 = vmatpush1.msra.mxu0 0.0
    %768 = vmatprep.subr.mxu0 0.0
    %769 = vmatpush1.msra.mxu0 0.0
    %770 = vmatprep.subr.mxu0 0.0
    %771 = vmatpush1.msra.mxu0 0.0
    %772 = vmatprep.subr.mxu0 0.0
    %773 = vmatpush1.msra.mxu0 0.0
    %774 = vmatprep.subr.mxu0 0.0
    %775 = vmatpush1.msra.mxu0 0.0
    %776 = vmatprep.subr.mxu0 0.0
    %777 = vmatpush1.msra.mxu0 0.0
    %778 = vmatprep.mubr.f32.mxu0 0.0
    %779 = vmatmul.mubr.f32.gmra.mrb[0].mxu0 %v220
    %v780 = vpop.f32.mrb[0].mxu0
    %v781 = vadd.f32 0.0, %v780
    %v782 = vpop.f32.mrb[0].mxu0
    %783 = vdwg.mxu0
    %784 = vmatprep.subr.mxu0 0.0
    %785 = vmatpush1.msra.mxu0 %v705
    %786 = vmatprep.subr.mxu0 0.0
    %787 = vmatpush1.msra.mxu0 %v706
    %788 = vmatprep.subr.mxu0 0.0
    %789 = vmatpush1.msra.mxu0 %v707
    %790 = vmatprep.subr.mxu0 0.0
    %791 = vmatpush1.msra.mxu0 %v708
    %792 = vmatprep.subr.mxu0 0.0
    %793 = vmatpush1.msra.mxu0 0.0
    %794 = vmatprep.subr.mxu0 0.0
    %795 = vmatpush1.msra.mxu0 0.0
    %796 = vmatprep.subr.mxu0 0.0
    %797 = vmatpush1.msra.mxu0 0.0
    %798 = vmatprep.subr.mxu0 0.0
    %799 = vmatpush1.msra.mxu0 0.0
    %800 = vmatprep.subr.mxu0 0.0
    %801 = vmatpush1.msra.mxu0 0.0
    %802 = vmatprep.subr.mxu0 0.0
    %803 = vmatpush1.msra.mxu0 0.0
    %804 = vmatprep.subr.mxu0 0.0
    %805 = vmatpush1.msra.mxu0 0.0
    %806 = vmatprep.subr.mxu0 0.0
    %807 = vmatpush1.msra.mxu0 0.0
    %808 = vmatprep.subr.mxu0 0.0
    %809 = vmatpush1.msra.mxu0 0.0
    %810 = vmatprep.subr.mxu0 0.0
    %811 = vmatpush1.msra.mxu0 0.0
    %812 = vmatprep.subr.mxu0 0.0
    %813 = vmatpush1.msra.mxu0 0.0
    %814 = vmatprep.subr.mxu0 0.0
    %815 = vmatpush1.msra.mxu0 0.0
    %816 = vmatprep.subr.mxu0 0.0
    %817 = vmatpush1.msra.mxu0 0.0
    %818 = vmatprep.subr.mxu0 0.0
    %819 = vmatpush1.msra.mxu0 0.0
    %820 = vmatprep.subr.mxu0 0.0
    %821 = vmatpush1.msra.mxu0 0.0
    %822 = vmatprep.subr.mxu0 0.0
    %823 = vmatpush1.msra.mxu0 0.0
    %824 = vmatprep.subr.mxu0 0.0
    %825 = vmatpush1.msra.mxu0 0.0
    %826 = vmatprep.subr.mxu0 0.0
    %827 = vmatpush1.msra.mxu0 0.0
    %828 = vmatprep.subr.mxu0 0.0
    %829 = vmatpush1.msra.mxu0 0.0
    %830 = vmatprep.subr.mxu0 0.0
    %831 = vmatpush1.msra.mxu0 0.0
    %832 = vmatprep.subr.mxu0 0.0
    %833 = vmatpush1.msra.mxu0 0.0
    %834 = vmatprep.subr.mxu0 0.0
    %835 = vmatpush1.msra.mxu0 0.0
    %836 = vmatprep.subr.mxu0 0.0
    %837 = vmatpush1.msra.mxu0 0.0
    %838 = vmatprep.subr.mxu0 0.0
    %839 = vmatpush1.msra.mxu0 0.0
    %840 = vmatprep.subr.mxu0 0.0
    %841 = vmatpush1.msra.mxu0 0.0
    %842 = vmatprep.subr.mxu0 0.0
    %843 = vmatpush1.msra.mxu0 0.0
    %844 = vmatprep.subr.mxu0 0.0
    %845 = vmatpush1.msra.mxu0 0.0
    %846 = vmatprep.subr.mxu0 0.0
    %847 = vmatpush1.msra.mxu0 0.0
    %848 = vmatprep.mubr.f32.mxu0 0.0
    %849 = vmatmul.mubr.f32.gmra.mrb[0].mxu0 %v293
    %v850 = vpop.f32.mrb[0].mxu0
    %v851 = vadd.f32 %v781, %v850
    %v852 = vpop.f32.mrb[0].mxu0
    %853 = vdwg.mxu0
    %s854 = scalar_lea.vmem [#allocation7], 3
    %v855 = vld [vmem:[%s854] sm:$0x1]
    %v857 = vlaneseq
    %v858 = vshrl.u32 %v857, 7
    %v859 = vsub.s32 0, %v858
    %v860 = vrot.slane %v855, %v859
    %v862 = vadd.f32 %v851, %v860
    %v863 = vxor.u32 %v862, 2147483648
    %v864 = vmul.f32 %v863, 1.442695
    %v865 = vpow.pop %v864
    %v866 = vadd.f32 %v865, 1.0
    %v867 = vrcp.pop %v866
    %v868 = vmul.f32 1.0, %v867
    %v869 = vmul.f32 %v543, %v209
    %v870 = vmul.f32 %v378, %v703
    %v871 = vadd.f32 %v869, %v870
    %v872 = vtanh.pop %v871
    %v873 = vmul.f32 %v868, %v872
    %v874 = vld [vmem:[%s2] sm:$0xff]
    %v875 = vld [vmem:[%s2 + $0x8] sm:$0xff]
    %v876 = vld [vmem:[%s2 + $0x10] sm:$0xff]
    %v877 = vld [vmem:[%s2 + $0x18] sm:$0xff]
    %v878 = vld [vmem:[%s2 + $0x20] sm:$0xff]
    %v879 = vld [vmem:[%s2 + $0x28] sm:$0xff]
    %v880 = vld [vmem:[%s2 + $0x30] sm:$0xff]
    %v881 = vld [vmem:[%s2 + $0x38] sm:$0xff]
    %v882 = vld [vmem:[%s8] sm:$0xff]
    %v883 = vld [vmem:[%s8 + $0x8] sm:$0xff]
    %v884 = vld [vmem:[%s8 + $0x10] sm:$0xff]
    %v885 = vld [vmem:[%s8 + $0x18] sm:$0xff]
    %v886 = vld [vmem:[#allocation8] sm:$0x1]
    %v888 = vlaneseq
    %v889 = vshrl.u32 %v888, 7
    %v890 = vsub.s32 0, %v889
    %v891 = vrot.slane %v886, %v890
    %v894 = vsel %vm218, %v873, 0
    %896 = vmatprep.subr.mxu0 0.0
    %897 = vmatpush1.msra.mxu0 %v882
    %898 = vmatprep.subr.mxu0 0.0
    %899 = vmatpush1.msra.mxu0 %v883
    %900 = vmatprep.subr.mxu0 0.0
    %901 = vmatpush1.msra.mxu0 %v884
    %902 = vmatprep.subr.mxu0 0.0
    %903 = vmatpush1.msra.mxu0 %v885
    %904 = vmatprep.subr.mxu0 0.0
    %905 = vmatpush1.msra.mxu0 0.0
    %906 = vmatprep.subr.mxu0 0.0
    %907 = vmatpush1.msra.mxu0 0.0
    %908 = vmatprep.subr.mxu0 0.0
    %909 = vmatpush1.msra.mxu0 0.0
    %910 = vmatprep.subr.mxu0 0.0
    %911 = vmatpush1.msra.mxu0 0.0
    %912 = vmatprep.subr.mxu0 0.0
    %913 = vmatpush1.msra.mxu0 0.0
    %914 = vmatprep.subr.mxu0 0.0
    %915 = vmatpush1.msra.mxu0 0.0
    %916 = vmatprep.subr.mxu0 0.0
    %917 = vmatpush1.msra.mxu0 0.0
    %918 = vmatprep.subr.mxu0 0.0
    %919 = vmatpush1.msra.mxu0 0.0
    %920 = vmatprep.subr.mxu0 0.0
    %921 = vmatpush1.msra.mxu0 0.0
    %922 = vmatprep.subr.mxu0 0.0
    %923 = vmatpush1.msra.mxu0 0.0
    %924 = vmatprep.subr.mxu0 0.0
    %925 = vmatpush1.msra.mxu0 0.0
    %926 = vmatprep.subr.mxu0 0.0
    %927 = vmatpush1.msra.mxu0 0.0
    %928 = vmatprep.subr.mxu0 0.0
    %929 = vmatpush1.msra.mxu0 0.0
    %930 = vmatprep.subr.mxu0 0.0
    %931 = vmatpush1.msra.mxu0 0.0
    %932 = vmatprep.subr.mxu0 0.0
    %933 = vmatpush1.msra.mxu0 0.0
    %934 = vmatprep.subr.mxu0 0.0
    %935 = vmatpush1.msra.mxu0 0.0
    %936 = vmatprep.subr.mxu0 0.0
    %937 = vmatpush1.msra.mxu0 0.0
    %938 = vmatprep.subr.mxu0 0.0
    %939 = vmatpush1.msra.mxu0 0.0
    %940 = vmatprep.subr.mxu0 0.0
    %941 = vmatpush1.msra.mxu0 0.0
    %942 = vmatprep.subr.mxu0 0.0
    %943 = vmatpush1.msra.mxu0 0.0
    %944 = vmatprep.subr.mxu0 0.0
    %945 = vmatpush1.msra.mxu0 0.0
    %946 = vmatprep.subr.mxu0 0.0
    %947 = vmatpush1.msra.mxu0 0.0
    %948 = vmatprep.subr.mxu0 0.0
    %949 = vmatpush1.msra.mxu0 0.0
    %950 = vmatprep.subr.mxu0 0.0
    %951 = vmatpush1.msra.mxu0 0.0
    %952 = vmatprep.subr.mxu0 0.0
    %953 = vmatpush1.msra.mxu0 0.0
    %954 = vmatprep.subr.mxu0 0.0
    %955 = vmatpush1.msra.mxu0 0.0
    %956 = vmatprep.subr.mxu0 0.0
    %957 = vmatpush1.msra.mxu0 0.0
    %958 = vmatprep.subr.mxu0 0.0
    %959 = vmatpush1.msra.mxu0 0.0
    %960 = vmatprep.mubr.f32.mxu0 0.0
    %961 = vmatmul.mubr.f32.gmra.mrb[0].mxu0 %v894
    %v962 = vpop.f32.mrb[0].mxu0
    %v963 = vadd.f32 %v891, %v962
    %v964 = vpop.f32.mrb[0].mxu0
    %965 = vdwg.mxu0
    %v966 = vld [vmem:[#allocation10] sm:$0xff]
    %v967 = vld [vmem:[#allocation10 + $0x8] sm:$0xff]
    %v968 = vld [vmem:[#allocation10 + $0x10] sm:$0xff]
    %v969 = vld [vmem:[#allocation10 + $0x18] sm:$0xff]
    %v971 = vsel %vm218, %v963, 0
    %973 = vmatprep.subr.mxu0 0.0
    %974 = vmatpush1.msra.mxu0 %v966
    %975 = vmatprep.subr.mxu0 0.0
    %976 = vmatpush1.msra.mxu0 %v967
    %977 = vmatprep.subr.mxu0 0.0
    %978 = vmatpush1.msra.mxu0 %v968
    %979 = vmatprep.subr.mxu0 0.0
    %980 = vmatpush1.msra.mxu0 %v969
    %981 = vmatprep.subr.mxu0 0.0
    %982 = vmatpush1.msra.mxu0 0.0
    %983 = vmatprep.subr.mxu0 0.0
    %984 = vmatpush1.msra.mxu0 0.0
    %985 = vmatprep.subr.mxu0 0.0
    %986 = vmatpush1.msra.mxu0 0.0
    %987 = vmatprep.subr.mxu0 0.0
    %988 = vmatpush1.msra.mxu0 0.0
    %989 = vmatprep.subr.mxu0 0.0
    %990 = vmatpush1.msra.mxu0 0.0
    %991 = vmatprep.subr.mxu0 0.0
    %992 = vmatpush1.msra.mxu0 0.0
    %993 = vmatprep.subr.mxu0 0.0
    %994 = vmatpush1.msra.mxu0 0.0
    %995 = vmatprep.subr.mxu0 0.0
    %996 = vmatpush1.msra.mxu0 0.0
    %997 = vmatprep.subr.mxu0 0.0
    %998 = vmatpush1.msra.mxu0 0.0
    %999 = vmatprep.subr.mxu0 0.0
    %1000 = vmatpush1.msra.mxu0 0.0
    %1001 = vmatprep.subr.mxu0 0.0
    %1002 = vmatpush1.msra.mxu0 0.0
    %1003 = vmatprep.subr.mxu0 0.0
    %1004 = vmatpush1.msra.mxu0 0.0
    %1005 = vmatprep.subr.mxu0 0.0
    %1006 = vmatpush1.msra.mxu0 0.0
    %1007 = vmatprep.subr.mxu0 0.0
    %1008 = vmatpush1.msra.mxu0 0.0
    %1009 = vmatprep.subr.mxu0 0.0
    %1010 = vmatpush1.msra.mxu0 0.0
    %1011 = vmatprep.subr.mxu0 0.0
    %1012 = vmatpush1.msra.mxu0 0.0
    %1013 = vmatprep.subr.mxu0 0.0
    %1014 = vmatpush1.msra.mxu0 0.0
    %1015 = vmatprep.subr.mxu0 0.0
    %1016 = vmatpush1.msra.mxu0 0.0
    %1017 = vmatprep.subr.mxu0 0.0
    %1018 = vmatpush1.msra.mxu0 0.0
    %1019 = vmatprep.subr.mxu0 0.0
    %1020 = vmatpush1.msra.mxu0 0.0
    %1021 = vmatprep.subr.mxu0 0.0
    %1022 = vmatpush1.msra.mxu0 0.0
    %1023 = vmatprep.subr.mxu0 0.0
    %1024 = vmatpush1.msra.mxu0 0.0
    %1025 = vmatprep.subr.mxu0 0.0
    %1026 = vmatpush1.msra.mxu0 0.0
    %1027 = vmatprep.subr.mxu0 0.0
    %1028 = vmatpush1.msra.mxu0 0.0
    %1029 = vmatprep.subr.mxu0 0.0
    %1030 = vmatpush1.msra.mxu0 0.0
    %1031 = vmatprep.subr.mxu0 0.0
    %1032 = vmatpush1.msra.mxu0 0.0
    %1033 = vmatprep.subr.mxu0 0.0
    %1034 = vmatpush1.msra.mxu0 0.0
    %1035 = vmatprep.subr.mxu0 0.0
    %1036 = vmatpush1.msra.mxu0 0.0
    %1037 = vmatprep.mubr.f32.mxu0 0.0
    %1038 = vmatmul.mubr.f32.gmra.mrb[0].mxu0 %v971
    %v1039 = vpop.f32.mrb[0].mxu0
    %v1040 = vadd.f32 0.0, %v1039
    %v1041 = vpop.f32.mrb[0].mxu0
    %1042 = vdwg.mxu0
    %v1044 = vcombine.high %v1040, %v1040
    %v1046 = vunpack.c.l.s4 1966171168
    %v1047 = vunpack.c.0.s8 %v1046
    %v1048 = vlaneseq
    %v1049 = vshrl.u32 %v1048, 7
    %v1050 = vsub.s32 %v1047, %v1049
    %v1051 = vrot.slane %v1040, %v1050
    %v1053 = vunpack.c.l.s4 1966171168
    %v1054 = vunpack.c.0.s8 %v1053
    %v1055 = vlaneseq
    %v1056 = vshrl.u32 %v1055, 7
    %v1057 = vsub.s32 %v1054, %v1056
    %v1058 = vrot.slane %v1044, %v1057
    %v1059 = vcombine.high %v1051, %v1051
    %v1060 = vcombine.high %v1058, %v1058
    %v1062 = vunpack.c.l.s4 1966171168
    %v1063 = vunpack.c.0.s8 %v1062
    %v1064 = vlaneseq
    %v1065 = vshrl.u32 %v1064, 7
    %v1066 = vsub.s32 %v1063, %v1065
    %v1067 = vrot.slane %v1051, %v1066
    %v1069 = vunpack.c.l.s4 1966171168
    %v1070 = vunpack.c.0.s8 %v1069
    %v1071 = vlaneseq
    %v1072 = vshrl.u32 %v1071, 7
    %v1073 = vsub.s32 %v1070, %v1072
    %v1074 = vrot.slane %v1058, %v1073
    %v1076 = vunpack.c.l.s4 1966171168
    %v1077 = vunpack.c.0.s8 %v1076
    %v1078 = vlaneseq
    %v1079 = vshrl.u32 %v1078, 7
    %v1080 = vsub.s32 %v1077, %v1079
    %v1081 = vrot.slane %v1059, %v1080
    %v1083 = vunpack.c.l.s4 1966171168
    %v1084 = vunpack.c.0.s8 %v1083
    %v1085 = vlaneseq
    %v1086 = vshrl.u32 %v1085, 7
    %v1087 = vsub.s32 %v1084, %v1086
    %v1088 = vrot.slane %v1060, %v1087
    %v1089 = vcombine.high %v1067, %v1067
    %v1090 = vcombine.high %v1074, %v1074
    %v1091 = vcombine.high %v1081, %v1081
    %v1092 = vcombine.high %v1088, %v1088
    %v1093 = vlaneseq
    %v1094 = vshrl.u32 %v1093, 7
    %v1095 = vsub.s32 0, %v1094
    %v1096 = vrot.slane %v1067, %v1095
    %v1097 = vlaneseq
    %v1098 = vshrl.u32 %v1097, 7
    %v1099 = vsub.s32 0, %v1098
    %v1100 = vrot.slane %v1081, %v1099
    %v1101 = vlaneseq
    %v1102 = vshrl.u32 %v1101, 7
    %v1103 = vsub.s32 0, %v1102
    %v1104 = vrot.slane %v1089, %v1103
    %v1105 = vlaneseq
    %v1106 = vshrl.u32 %v1105, 7
    %v1107 = vsub.s32 0, %v1106
    %v1108 = vrot.slane %v1091, %v1107
    %v1109 = vlaneseq
    %v1110 = vshrl.u32 %v1109, 7
    %v1111 = vsub.s32 0, %v1110
    %v1112 = vrot.slane %v1074, %v1111
    %v1113 = vlaneseq
    %v1114 = vshrl.u32 %v1113, 7
    %v1115 = vsub.s32 0, %v1114
    %v1116 = vrot.slane %v1088, %v1115
    %v1117 = vlaneseq
    %v1118 = vshrl.u32 %v1117, 7
    %v1119 = vsub.s32 0, %v1118
    %v1120 = vrot.slane %v1090, %v1119
    %v1121 = vlaneseq
    %v1122 = vshrl.u32 %v1121, 7
    %v1123 = vsub.s32 0, %v1122
    %v1124 = vrot.slane %v1092, %v1123
    %v1133 = vmul.f32 %v874, %v1096
    %v1134 = vmul.f32 %v875, %v1100
    %v1135 = vmul.f32 %v876, %v1104
    %v1136 = vmul.f32 %v877, %v1108
    %v1137 = vmul.f32 %v878, %v1112
    %v1138 = vmul.f32 %v879, %v1116
    %v1139 = vmul.f32 %v880, %v1120
    %v1140 = vmul.f32 %v881, %v1124
    %v1141 = vsel %vm218, %v1133, 0.0
    %1142 = vadd.xlane.f32.xlu0 %v1141
    %v1143 = vpop.xlane.xlu0 %1142
    %v1144 = vsel %vm218, %v1134, 0.0
    %1145 = vadd.xlane.f32.xlu0 %v1144
    %v1146 = vpop.xlane.xlu0 %1145
    %v1147 = vsel %vm218, %v1135, 0.0
    %1148 = vadd.xlane.f32.xlu0 %v1147
    %v1149 = vpop.xlane.xlu0 %1148
    %v1150 = vsel %vm218, %v1136, 0.0
    %1151 = vadd.xlane.f32.xlu0 %v1150
    %v1152 = vpop.xlane.xlu0 %1151
    %v1153 = vsel %vm218, %v1137, 0.0
    %1154 = vadd.xlane.f32.xlu0 %v1153
    %v1155 = vpop.xlane.xlu0 %1154
    %v1156 = vsel %vm218, %v1138, 0.0
    %1157 = vadd.xlane.f32.xlu0 %v1156
    %v1158 = vpop.xlane.xlu0 %1157
    %v1159 = vsel %vm218, %v1139, 0.0
    %1160 = vadd.xlane.f32.xlu0 %v1159
    %v1161 = vpop.xlane.xlu0 %1160
    %v1162 = vsel %vm218, %v1140, 0.0
    %1163 = vadd.xlane.f32.xlu0 %v1162
    %v1164 = vpop.xlane.xlu0 %1163
    %v1173 = vlaneseq
    %v1174 = vand.u32 %v1173, 127
    %v1175 = vlaneseq
    %v1176 = vshrl.u32 %v1175, 7
    %v1177 = vsub.s32 %v1174, %v1176
    %v1178 = vrot.slane %v1143, %v1177
    %v1179 = vlaneseq
    %v1180 = vshrl.u32 %v1179, 7
    %v1181 = vsub.s32 %v1174, %v1180
    %v1182 = vrot.slane %v1146, %v1181
    %v1183 = vlaneseq
    %v1184 = vshrl.u32 %v1183, 7
    %v1185 = vsub.s32 %v1174, %v1184
    %v1186 = vrot.slane %v1149, %v1185
    %v1187 = vlaneseq
    %v1188 = vshrl.u32 %v1187, 7
    %v1189 = vsub.s32 %v1174, %v1188
    %v1190 = vrot.slane %v1152, %v1189
    %v1191 = vlaneseq
    %v1192 = vshrl.u32 %v1191, 7
    %v1193 = vsub.s32 %v1174, %v1192
    %v1194 = vrot.slane %v1155, %v1193
    %v1195 = vlaneseq
    %v1196 = vshrl.u32 %v1195, 7
    %v1197 = vsub.s32 %v1174, %v1196
    %v1198 = vrot.slane %v1158, %v1197
    %v1199 = vlaneseq
    %v1200 = vshrl.u32 %v1199, 7
    %v1201 = vsub.s32 %v1174, %v1200
    %v1202 = vrot.slane %v1161, %v1201
    %v1203 = vlaneseq
    %v1204 = vshrl.u32 %v1203, 7
    %v1205 = vsub.s32 %v1174, %v1204
    %v1206 = vrot.slane %v1164, %v1205
    %vm1207 = vcmask 1041409
    %v1208 = vsel %vm1207, %v1182, %v1178
    %vm1209 = vcmask 1042434
    %v1210 = vsel %vm1209, %v1186, %v1208
    %vm1211 = vcmask 1043459
    %v1212 = vsel %vm1211, %v1190, %v1210
    %vm1213 = vcmask 1044484
    %v1214 = vsel %vm1213, %v1194, %v1212
    %vm1215 = vcmask 1045509
    %v1216 = vsel %vm1215, %v1198, %v1214
    %vm1217 = vcmask 1046534
    %v1218 = vsel %vm1217, %v1202, %v1216
    %vm1219 = vcmask 1047559
    %v1220 = vsel %vm1219, %v1206, %v1218
    %vm1222 = vcmask 64512
    %v1223 = vsel %vm1222, %v1220, -inf
    %1224 = vmax.xlane.f32.xlu0 %v1223
    %v1225 = vpop.xlane.xlu0 %1224
    %v1227 = vlaneseq
    %v1228 = vshrl.u32 %v1227, 7
    %v1229 = vsub.s32 0, %v1228
    %v1230 = vrot.slane %v1225, %v1229
    %v1231 = vlaneseq
    %v1232 = vshrl.u32 %v1231, 7
    %v1233 = vsub.s32 1, %v1232
    %v1234 = vrot.slane %v1225, %v1233
    %v1235 = vlaneseq
    %v1236 = vshrl.u32 %v1235, 7
    %v1237 = vsub.s32 2, %v1236
    %v1238 = vrot.slane %v1225, %v1237
    %v1239 = vlaneseq
    %v1240 = vshrl.u32 %v1239, 7
    %v1241 = vsub.s32 3, %v1240
    %v1242 = vrot.slane %v1225, %v1241
    %v1243 = vlaneseq
    %v1244 = vshrl.u32 %v1243, 7
    %v1245 = vsub.s32 4, %v1244
    %v1246 = vrot.slane %v1225, %v1245
    %v1247 = vlaneseq
    %v1248 = vshrl.u32 %v1247, 7
    %v1249 = vsub.s32 5, %v1248
    %v1250 = vrot.slane %v1225, %v1249
    %v1251 = vlaneseq
    %v1252 = vshrl.u32 %v1251, 7
    %v1253 = vsub.s32 6, %v1252
    %v1254 = vrot.slane %v1225, %v1253
    %v1255 = vlaneseq
    %v1256 = vshrl.u32 %v1255, 7
    %v1257 = vsub.s32 7, %v1256
    %v1258 = vrot.slane %v1225, %v1257
    %v1267 = vsub.f32 %v1143, %v1230
    %v1268 = vsub.f32 %v1146, %v1234
    %v1269 = vsub.f32 %v1149, %v1238
    %v1270 = vsub.f32 %v1152, %v1242
    %v1271 = vsub.f32 %v1155, %v1246
    %v1272 = vsub.f32 %v1158, %v1250
    %v1273 = vsub.f32 %v1161, %v1254
    %v1274 = vsub.f32 %v1164, %v1258
    %v1275 = vmul.f32 %v1267, 1.442695
    %v1276 = vpow.pop %v1275
    %v1277 = vmul.f32 %v1268, 1.442695
    %v1278 = vpow.pop %v1277
    %v1279 = vmul.f32 %v1269, 1.442695
    %v1280 = vpow.pop %v1279
    %v1281 = vmul.f32 %v1270, 1.442695
    %v1282 = vpow.pop %v1281
    %v1283 = vmul.f32 %v1271, 1.442695
    %v1284 = vpow.pop %v1283
    %v1285 = vmul.f32 %v1272, 1.442695
    %v1286 = vpow.pop %v1285
    %v1287 = vmul.f32 %v1273, 1.442695
    %v1288 = vpow.pop %v1287
    %v1289 = vmul.f32 %v1274, 1.442695
    %v1290 = vpow.pop %v1289
    %1299 = vset.pattern.permute.xlu0 0
    %1300 = vperm.xlu0 %1299, %v1276
    %v1301 = vpop.permute.xlu0 %1300
    %1302 = vset.pattern.permute.xlu0 0
    %1303 = vperm.xlu0 %1302, %v1278
    %v1304 = vpop.permute.xlu0 %1303
    %1305 = vset.pattern.permute.xlu0 0
    %1306 = vperm.xlu0 %1305, %v1280
    %v1307 = vpop.permute.xlu0 %1306
    %1308 = vset.pattern.permute.xlu0 0
    %1309 = vperm.xlu0 %1308, %v1282
    %v1310 = vpop.permute.xlu0 %1309
    %1311 = vset.pattern.permute.xlu0 0
    %1312 = vperm.xlu0 %1311, %v1284
    %v1313 = vpop.permute.xlu0 %1312
    %1314 = vset.pattern.permute.xlu0 0
    %1315 = vperm.xlu0 %1314, %v1286
    %v1316 = vpop.permute.xlu0 %1315
    %1317 = vset.pattern.permute.xlu0 0
    %1318 = vperm.xlu0 %1317, %v1288
    %v1319 = vpop.permute.xlu0 %1318
    %1320 = vset.pattern.permute.xlu0 0
    %1321 = vperm.xlu0 %1320, %v1290
    %v1322 = vpop.permute.xlu0 %1321
    %v1323 = vlaneseq
    %v1324 = vshrl.u32 %v1323, 7
    %v1325 = vsub.s32 %v1174, %v1324
    %v1326 = vrot.slane %v1301, %v1325
    %v1327 = vlaneseq
    %v1328 = vshrl.u32 %v1327, 7
    %v1329 = vsub.s32 %v1174, %v1328
    %v1330 = vrot.slane %v1304, %v1329
    %v1331 = vlaneseq
    %v1332 = vshrl.u32 %v1331, 7
    %v1333 = vsub.s32 %v1174, %v1332
    %v1334 = vrot.slane %v1307, %v1333
    %v1335 = vlaneseq
    %v1336 = vshrl.u32 %v1335, 7
    %v1337 = vsub.s32 %v1174, %v1336
    %v1338 = vrot.slane %v1310, %v1337
    %v1339 = vlaneseq
    %v1340 = vshrl.u32 %v1339, 7
    %v1341 = vsub.s32 %v1174, %v1340
    %v1342 = vrot.slane %v1313, %v1341
    %v1343 = vlaneseq
    %v1344 = vshrl.u32 %v1343, 7
    %v1345 = vsub.s32 %v1174, %v1344
    %v1346 = vrot.slane %v1316, %v1345
    %v1347 = vlaneseq
    %v1348 = vshrl.u32 %v1347, 7
    %v1349 = vsub.s32 %v1174, %v1348
    %v1350 = vrot.slane %v1319, %v1349
    %v1351 = vlaneseq
    %v1352 = vshrl.u32 %v1351, 7
    %v1353 = vsub.s32 %v1174, %v1352
    %v1354 = vrot.slane %v1322, %v1353
    %v1355 = vsel %vm1207, %v1330, %v1326
    %v1356 = vsel %vm1209, %v1334, %v1355
    %v1357 = vsel %vm1211, %v1338, %v1356
    %v1358 = vsel %vm1213, %v1342, %v1357
    %v1359 = vsel %vm1215, %v1346, %v1358
    %v1360 = vsel %vm1217, %v1350, %v1359
    %v1361 = vsel %vm1219, %v1354, %v1360
    %v1363 = vsel %vm1222, %v1361, 0.0
    %1364 = vadd.xlane.f32.xlu0 %v1363
    %v1365 = vpop.xlane.xlu0 %1364
    %v1367 = vlaneseq
    %v1368 = vshrl.u32 %v1367, 7
    %v1369 = vsub.s32 0, %v1368
    %v1370 = vrot.slane %v1365, %v1369
    %v1371 = vlaneseq
    %v1372 = vshrl.u32 %v1371, 7
    %v1373 = vsub.s32 1, %v1372
    %v1374 = vrot.slane %v1365, %v1373
    %v1375 = vlaneseq
    %v1376 = vshrl.u32 %v1375, 7
    %v1377 = vsub.s32 2, %v1376
    %v1378 = vrot.slane %v1365, %v1377
    %v1379 = vlaneseq
    %v1380 = vshrl.u32 %v1379, 7
    %v1381 = vsub.s32 3, %v1380
    %v1382 = vrot.slane %v1365, %v1381
    %v1383 = vlaneseq
    %v1384 = vshrl.u32 %v1383, 7
    %v1385 = vsub.s32 4, %v1384
    %v1386 = vrot.slane %v1365, %v1385
    %v1387 = vlaneseq
    %v1388 = vshrl.u32 %v1387, 7
    %v1389 = vsub.s32 5, %v1388
    %v1390 = vrot.slane %v1365, %v1389
    %v1391 = vlaneseq
    %v1392 = vshrl.u32 %v1391, 7
    %v1393 = vsub.s32 6, %v1392
    %v1394 = vrot.slane %v1365, %v1393
    %v1395 = vlaneseq
    %v1396 = vshrl.u32 %v1395, 7
    %v1397 = vsub.s32 7, %v1396
    %v1398 = vrot.slane %v1365, %v1397
    %v1407 = vrcp.pop %v1370
    %v1408 = vmul.f32 %v1276, %v1407
    %v1409 = vrcp.pop %v1374
    %v1410 = vmul.f32 %v1278, %v1409
    %v1411 = vrcp.pop %v1378
    %v1412 = vmul.f32 %v1280, %v1411
    %v1413 = vrcp.pop %v1382
    %v1414 = vmul.f32 %v1282, %v1413
    %v1415 = vrcp.pop %v1386
    %v1416 = vmul.f32 %v1284, %v1415
    %v1417 = vrcp.pop %v1390
    %v1418 = vmul.f32 %v1286, %v1417
    %v1419 = vrcp.pop %v1394
    %v1420 = vmul.f32 %v1288, %v1419
    %v1421 = vrcp.pop %v1398
    %v1422 = vmul.f32 %v1290, %v1421
    %1424 = vset.pattern.permute.xlu0 0
    %1425 = vperm.xlu0 %1424, %v1408
    %v1426 = vpop.permute.xlu0 %1425
    %1429 = vset.pattern.permute.xlu0 0
    %1430 = vperm.xlu0 %1429, %v1410
    %v1431 = vpop.permute.xlu0 %1430
    %1434 = vset.pattern.permute.xlu0 0
    %1435 = vperm.xlu0 %1434, %v1412
    %v1436 = vpop.permute.xlu0 %1435
    %1439 = vset.pattern.permute.xlu0 0
    %1440 = vperm.xlu0 %1439, %v1414
    %v1441 = vpop.permute.xlu0 %1440
    %1444 = vset.pattern.permute.xlu0 0
    %1445 = vperm.xlu0 %1444, %v1416
    %v1446 = vpop.permute.xlu0 %1445
    %1449 = vset.pattern.permute.xlu0 0
    %1450 = vperm.xlu0 %1449, %v1418
    %v1451 = vpop.permute.xlu0 %1450
    %1454 = vset.pattern.permute.xlu0 0
    %1455 = vperm.xlu0 %1454, %v1420
    %v1456 = vpop.permute.xlu0 %1455
    %1459 = vset.pattern.permute.xlu0 0
    %1460 = vperm.xlu0 %1459, %v1422
    %v1461 = vpop.permute.xlu0 %1460
    %v1463 = vmul.f32 %v874, %v1426
    %v1464 = vmul.f32 %v875, %v1431
    %v1465 = vmul.f32 %v876, %v1436
    %v1466 = vmul.f32 %v877, %v1441
    %v1467 = vmul.f32 %v878, %v1446
    %v1468 = vmul.f32 %v879, %v1451
    %v1469 = vmul.f32 %v880, %v1456
    %v1470 = vmul.f32 %v881, %v1461
    %v1471 = vsel %vm218, %v1463, 0.0
    %v1472 = vrot.slane %v1471, 4
    %v1473 = vadd.f32 %v1471, %v1472
    %v1474 = vrot.slane %v1473, 2
    %v1475 = vadd.f32 %v1473, %v1474
    %v1476 = vrot.slane %v1475, 1
    %v1477 = vadd.f32 %v1475, %v1476
    %v1478 = vsel %vm218, %v1464, 0.0
    %v1479 = vrot.slane %v1478, 4
    %v1480 = vadd.f32 %v1478, %v1479
    %v1481 = vrot.slane %v1480, 2
    %v1482 = vadd.f32 %v1480, %v1481
    %v1483 = vrot.slane %v1482, 1
    %v1484 = vadd.f32 %v1482, %v1483
    %v1485 = vsel %vm218, %v1465, 0.0
    %v1486 = vrot.slane %v1485, 4
    %v1487 = vadd.f32 %v1485, %v1486
    %v1488 = vrot.slane %v1487, 2
    %v1489 = vadd.f32 %v1487, %v1488
    %v1490 = vrot.slane %v1489, 1
    %v1491 = vadd.f32 %v1489, %v1490
    %v1492 = vsel %vm218, %v1466, 0.0
    %v1493 = vrot.slane %v1492, 4
    %v1494 = vadd.f32 %v1492, %v1493
    %v1495 = vrot.slane %v1494, 2
    %v1496 = vadd.f32 %v1494, %v1495
    %v1497 = vrot.slane %v1496, 1
    %v1498 = vadd.f32 %v1496, %v1497
    %v1499 = vsel %vm218, %v1467, 0.0
    %v1500 = vrot.slane %v1499, 4
    %v1501 = vadd.f32 %v1499, %v1500
    %v1502 = vrot.slane %v1501, 2
    %v1503 = vadd.f32 %v1501, %v1502
    %v1504 = vrot.slane %v1503, 1
    %v1505 = vadd.f32 %v1503, %v1504
    %v1506 = vsel %vm218, %v1468, 0.0
    %v1507 = vrot.slane %v1506, 4
    %v1508 = vadd.f32 %v1506, %v1507
    %v1509 = vrot.slane %v1508, 2
    %v1510 = vadd.f32 %v1508, %v1509
    %v1511 = vrot.slane %v1510, 1
    %v1512 = vadd.f32 %v1510, %v1511
    %v1513 = vsel %vm218, %v1469, 0.0
    %v1514 = vrot.slane %v1513, 4
    %v1515 = vadd.f32 %v1513, %v1514
    %v1516 = vrot.slane %v1515, 2
    %v1517 = vadd.f32 %v1515, %v1516
    %v1518 = vrot.slane %v1517, 1
    %v1519 = vadd.f32 %v1517, %v1518
    %v1520 = vsel %vm218, %v1470, 0.0
    %v1521 = vrot.slane %v1520, 4
    %v1522 = vadd.f32 %v1520, %v1521
    %v1523 = vrot.slane %v1522, 2
    %v1524 = vadd.f32 %v1522, %v1523
    %v1525 = vrot.slane %v1524, 1
    %v1526 = vadd.f32 %v1524, %v1525
    %v1527 = vld [vmem:[#allocation11] sm:$0xff]
    %v1528 = vld [vmem:[#allocation11 + $0x8] sm:$0xff]
    %v1529 = vld [vmem:[#allocation11 + $0x10] sm:$0xff]
    %v1530 = vld [vmem:[#allocation11 + $0x18] sm:$0xff]
    %v1531 = vld [vmem:[#allocation13] sm:$0xff]
    %v1532 = vld [vmem:[#allocation13 + $0x8] sm:$0xff]
    %v1533 = vld [vmem:[#allocation13 + $0x10] sm:$0xff]
    %v1534 = vld [vmem:[#allocation13 + $0x18] sm:$0xff]
    %v1543 = vsel %vm1207, %v1484, %v1477
    %v1544 = vsel %vm1209, %v1491, %v1543
    %v1545 = vsel %vm1211, %v1498, %v1544
    %v1546 = vsel %vm1213, %v1505, %v1545
    %v1547 = vsel %vm1215, %v1512, %v1546
    %v1548 = vsel %vm1217, %v1519, %v1547
    %v1549 = vsel %vm1219, %v1526, %v1548
    %v1550 = vsel %vm218, %v1549, 0
    %1552 = vmatprep.subr.mxu0 0.0
    %1553 = vmatpush1.msra.mxu0 %v1531
    %1554 = vmatprep.subr.mxu0 0.0
    %1555 = vmatpush1.msra.mxu0 %v1532
    %1556 = vmatprep.subr.mxu0 0.0
    %1557 = vmatpush1.msra.mxu0 %v1533
    %1558 = vmatprep.subr.mxu0 0.0
    %1559 = vmatpush1.msra.mxu0 %v1534
    %1560 = vmatprep.subr.mxu0 0.0
    %1561 = vmatpush1.msra.mxu0 0.0
    %1562 = vmatprep.subr.mxu0 0.0
    %1563 = vmatpush1.msra.mxu0 0.0
    %1564 = vmatprep.subr.mxu0 0.0
    %1565 = vmatpush1.msra.mxu0 0.0
    %1566 = vmatprep.subr.mxu0 0.0
    %1567 = vmatpush1.msra.mxu0 0.0
    %1568 = vmatprep.subr.mxu0 0.0
    %1569 = vmatpush1.msra.mxu0 0.0
    %1570 = vmatprep.subr.mxu0 0.0
    %1571 = vmatpush1.msra.mxu0 0.0
    %1572 = vmatprep.subr.mxu0 0.0
    %1573 = vmatpush1.msra.mxu0 0.0
    %1574 = vmatprep.subr.mxu0 0.0
    %1575 = vmatpush1.msra.mxu0 0.0
    %1576 = vmatprep.subr.mxu0 0.0
    %1577 = vmatpush1.msra.mxu0 0.0
    %1578 = vmatprep.subr.mxu0 0.0
    %1579 = vmatpush1.msra.mxu0 0.0
    %1580 = vmatprep.subr.mxu0 0.0
    %1581 = vmatpush1.msra.mxu0 0.0
    %1582 = vmatprep.subr.mxu0 0.0
    %1583 = vmatpush1.msra.mxu0 0.0
    %1584 = vmatprep.subr.mxu0 0.0
    %1585 = vmatpush1.msra.mxu0 0.0
    %1586 = vmatprep.subr.mxu0 0.0
    %1587 = vmatpush1.msra.mxu0 0.0
    %1588 = vmatprep.subr.mxu0 0.0
    %1589 = vmatpush1.msra.mxu0 0.0
    %1590 = vmatprep.subr.mxu0 0.0
    %1591 = vmatpush1.msra.mxu0 0.0
    %1592 = vmatprep.subr.mxu0 0.0
    %1593 = vmatpush1.msra.mxu0 0.0
    %1594 = vmatprep.subr.mxu0 0.0
    %1595 = vmatpush1.msra.mxu0 0.0
    %1596 = vmatprep.subr.mxu0 0.0
    %1597 = vmatpush1.msra.mxu0 0.0
    %1598 = vmatprep.subr.mxu0 0.0
    %1599 = vmatpush1.msra.mxu0 0.0
    %1600 = vmatprep.subr.mxu0 0.0
    %1601 = vmatpush1.msra.mxu0 0.0
    %1602 = vmatprep.subr.mxu0 0.0
    %1603 = vmatpush1.msra.mxu0 0.0
    %1604 = vmatprep.subr.mxu0 0.0
    %1605 = vmatpush1.msra.mxu0 0.0
    %1606 = vmatprep.subr.mxu0 0.0
    %1607 = vmatpush1.msra.mxu0 0.0
    %1608 = vmatprep.subr.mxu0 0.0
    %1609 = vmatpush1.msra.mxu0 0.0
    %1610 = vmatprep.subr.mxu0 0.0
    %1611 = vmatpush1.msra.mxu0 0.0
    %1612 = vmatprep.subr.mxu0 0.0
    %1613 = vmatpush1.msra.mxu0 0.0
    %1614 = vmatprep.subr.mxu0 0.0
    %1615 = vmatpush1.msra.mxu0 0.0
    %1616 = vmatprep.mubr.f32.mxu0 0.0
    %1617 = vmatmul.mubr.f32.gmra.mrb[0].mxu0 %v1550
    %v1618 = vpop.f32.mrb[0].mxu0
    %v1619 = vadd.f32 0.0, %v1618
    %v1620 = vpop.f32.mrb[0].mxu0
    %1621 = vdwg.mxu0
    %1622 = vmatprep.subr.mxu0 0.0
    %1623 = vmatpush1.msra.mxu0 %v1527
    %1624 = vmatprep.subr.mxu0 0.0
    %1625 = vmatpush1.msra.mxu0 %v1528
    %1626 = vmatprep.subr.mxu0 0.0
    %1627 = vmatpush1.msra.mxu0 %v1529
    %1628 = vmatprep.subr.mxu0 0.0
    %1629 = vmatpush1.msra.mxu0 %v1530
    %1630 = vmatprep.subr.mxu0 0.0
    %1631 = vmatpush1.msra.mxu0 0.0
    %1632 = vmatprep.subr.mxu0 0.0
    %1633 = vmatpush1.msra.mxu0 0.0
    %1634 = vmatprep.subr.mxu0 0.0
    %1635 = vmatpush1.msra.mxu0 0.0
    %1636 = vmatprep.subr.mxu0 0.0
    %1637 = vmatpush1.msra.mxu0 0.0
    %1638 = vmatprep.subr.mxu0 0.0
    %1639 = vmatpush1.msra.mxu0 0.0
    %1640 = vmatprep.subr.mxu0 0.0
    %1641 = vmatpush1.msra.mxu0 0.0
    %1642 = vmatprep.subr.mxu0 0.0
    %1643 = vmatpush1.msra.mxu0 0.0
    %1644 = vmatprep.subr.mxu0 0.0
    %1645 = vmatpush1.msra.mxu0 0.0
    %1646 = vmatprep.subr.mxu0 0.0
    %1647 = vmatpush1.msra.mxu0 0.0
    %1648 = vmatprep.subr.mxu0 0.0
    %1649 = vmatpush1.msra.mxu0 0.0
    %1650 = vmatprep.subr.mxu0 0.0
    %1651 = vmatpush1.msra.mxu0 0.0
    %1652 = vmatprep.subr.mxu0 0.0
    %1653 = vmatpush1.msra.mxu0 0.0
    %1654 = vmatprep.subr.mxu0 0.0
    %1655 = vmatpush1.msra.mxu0 0.0
    %1656 = vmatprep.subr.mxu0 0.0
    %1657 = vmatpush1.msra.mxu0 0.0
    %1658 = vmatprep.subr.mxu0 0.0
    %1659 = vmatpush1.msra.mxu0 0.0
    %1660 = vmatprep.subr.mxu0 0.0
    %1661 = vmatpush1.msra.mxu0 0.0
    %1662 = vmatprep.subr.mxu0 0.0
    %1663 = vmatpush1.msra.mxu0 0.0
    %1664 = vmatprep.subr.mxu0 0.0
    %1665 = vmatpush1.msra.mxu0 0.0
    %1666 = vmatprep.subr.mxu0 0.0
    %1667 = vmatpush1.msra.mxu0 0.0
    %1668 = vmatprep.subr.mxu0 0.0
    %1669 = vmatpush1.msra.mxu0 0.0
    %1670 = vmatprep.subr.mxu0 0.0
    %1671 = vmatpush1.msra.mxu0 0.0
    %1672 = vmatprep.subr.mxu0 0.0
    %1673 = vmatpush1.msra.mxu0 0.0
    %1674 = vmatprep.subr.mxu0 0.0
    %1675 = vmatpush1.msra.mxu0 0.0
    %1676 = vmatprep.subr.mxu0 0.0
    %1677 = vmatpush1.msra.mxu0 0.0
    %1678 = vmatprep.subr.mxu0 0.0
    %1679 = vmatpush1.msra.mxu0 0.0
    %1680 = vmatprep.subr.mxu0 0.0
    %1681 = vmatpush1.msra.mxu0 0.0
    %1682 = vmatprep.subr.mxu0 0.0
    %1683 = vmatpush1.msra.mxu0 0.0
    %1684 = vmatprep.subr.mxu0 0.0
    %1685 = vmatpush1.msra.mxu0 0.0
    %1686 = vmatprep.mubr.f32.mxu0 0.0
    %1687 = vmatmul.mubr.f32.gmra.mrb[0].mxu0 %v894
    %v1688 = vpop.f32.mrb[0].mxu0
    %v1689 = vadd.f32 %v1619, %v1688
    %v1690 = vpop.f32.mrb[0].mxu0
    %1691 = vdwg.mxu0
    %v1692 = vld [vmem:[#allocation14] sm:$0x1]
    %v1694 = vlaneseq
    %v1695 = vshrl.u32 %v1694, 7
    %v1696 = vsub.s32 0, %v1695
    %v1697 = vrot.slane %v1692, %v1696
    %v1699 = vadd.f32 %v1689, %v1697
    %v1700 = vld [vmem:[#allocation16] sm:$0xff]
    %v1701 = vld [vmem:[#allocation16 + $0x8] sm:$0xff]
    %v1702 = vld [vmem:[#allocation16 + $0x10] sm:$0xff]
    %v1703 = vld [vmem:[#allocation16 + $0x18] sm:$0xff]
    %v1704 = vld [vmem:[#allocation17] sm:$0x1]
    %v1706 = vlaneseq
    %v1707 = vshrl.u32 %v1706, 7
    %v1708 = vsub.s32 0, %v1707
    %v1709 = vrot.slane %v1704, %v1708
    %v1712 = vsel %vm218, %v1699, 0
    %1714 = vmatprep.subr.mxu0 0.0
    %1715 = vmatpush1.msra.mxu0 %v1700
    %1716 = vmatprep.subr.mxu0 0.0
    %1717 = vmatpush1.msra.mxu0 %v1701
    %1718 = vmatprep.subr.mxu0 0.0
    %1719 = vmatpush1.msra.mxu0 %v1702
    %1720 = vmatprep.subr.mxu0 0.0
    %1721 = vmatpush1.msra.mxu0 %v1703
    %1722 = vmatprep.subr.mxu0 0.0
    %1723 = vmatpush1.msra.mxu0 0.0
    %1724 = vmatprep.subr.mxu0 0.0
    %1725 = vmatpush1.msra.mxu0 0.0
    %1726 = vmatprep.subr.mxu0 0.0
    %1727 = vmatpush1.msra.mxu0 0.0
    %1728 = vmatprep.subr.mxu0 0.0
    %1729 = vmatpush1.msra.mxu0 0.0
    %1730 = vmatprep.subr.mxu0 0.0
    %1731 = vmatpush1.msra.mxu0 0.0
    %1732 = vmatprep.subr.mxu0 0.0
    %1733 = vmatpush1.msra.mxu0 0.0
    %1734 = vmatprep.subr.mxu0 0.0
    %1735 = vmatpush1.msra.mxu0 0.0
    %1736 = vmatprep.subr.mxu0 0.0
    %1737 = vmatpush1.msra.mxu0 0.0
    %1738 = vmatprep.subr.mxu0 0.0
    %1739 = vmatpush1.msra.mxu0 0.0
    %1740 = vmatprep.subr.mxu0 0.0
    %1741 = vmatpush1.msra.mxu0 0.0
    %1742 = vmatprep.subr.mxu0 0.0
    %1743 = vmatpush1.msra.mxu0 0.0
    %1744 = vmatprep.subr.mxu0 0.0
    %1745 = vmatpush1.msra.mxu0 0.0
    %1746 = vmatprep.subr.mxu0 0.0
    %1747 = vmatpush1.msra.mxu0 0.0
    %1748 = vmatprep.subr.mxu0 0.0
    %1749 = vmatpush1.msra.mxu0 0.0
    %1750 = vmatprep.subr.mxu0 0.0
    %1751 = vmatpush1.msra.mxu0 0.0
    %1752 = vmatprep.subr.mxu0 0.0
    %1753 = vmatpush1.msra.mxu0 0.0
    %1754 = vmatprep.subr.mxu0 0.0
    %1755 = vmatpush1.msra.mxu0 0.0
    %1756 = vmatprep.subr.mxu0 0.0
    %1757 = vmatpush1.msra.mxu0 0.0
    %1758 = vmatprep.subr.mxu0 0.0
    %1759 = vmatpush1.msra.mxu0 0.0
    %1760 = vmatprep.subr.mxu0 0.0
    %1761 = vmatpush1.msra.mxu0 0.0
    %1762 = vmatprep.subr.mxu0 0.0
    %1763 = vmatpush1.msra.mxu0 0.0
    %1764 = vmatprep.subr.mxu0 0.0
    %1765 = vmatpush1.msra.mxu0 0.0
    %1766 = vmatprep.subr.mxu0 0.0
    %1767 = vmatpush1.msra.mxu0 0.0
    %1768 = vmatprep.subr.mxu0 0.0
    %1769 = vmatpush1.msra.mxu0 0.0
    %1770 = vmatprep.subr.mxu0 0.0
    %1771 = vmatpush1.msra.mxu0 0.0
    %1772 = vmatprep.subr.mxu0 0.0
    %1773 = vmatpush1.msra.mxu0 0.0
    %1774 = vmatprep.subr.mxu0 0.0
    %1775 = vmatpush1.msra.mxu0 0.0
    %1776 = vmatprep.subr.mxu0 0.0
    %1777 = vmatpush1.msra.mxu0 0.0
    %1778 = vmatprep.mubr.f32.mxu0 0.0
    %1779 = vmatmul.mubr.f32.gmra.mrb[0].mxu0 %v1712
    %v1780 = vpop.f32.mrb[0].mxu0
    %v1781 = vadd.f32 %v1709, %v1780
    %v1782 = vpop.f32.mrb[0].mxu0
    %1783 = vdwg.mxu0
    %1784 = vmax.xlane.f32.xlu0 %v1781
    %v1785 = vpop.xlane.xlu0 %1784
    %v1786 = vsub.f32 %v1781, %v1785
    %v1787 = vmul.f32 %v1786, 1.442695
    %v1788 = vpow.pop %v1787
    %1789 = vadd.xlane.f32.xlu0 %v1788
    %v1790 = vpop.xlane.xlu0 %1789
    %v1791 = vlog2.pop %v1790
    %v1792 = vmul.f32 %v1791, 0.6931472
    %v1793 = vadd.f32 %v1785, %v1792
    %v1794 = vsub.f32 %v1781, %v1793
    %1795 = vst [vmem:[#allocation19] sm:$0xff] %v1794
    %1796 = vst.msk [vmem:[#allocation20] sm:$0xff] %vm218, %v1699
    %1797 = vst.msk [vmem:[#allocation22] sm:$0xff] %vm218, %v871
    // Predicated region
    $region102: #{decoder_lstm_att_forward.1} parent=1 // pred_check
      _
    $region103: #{decoder_lstm_att_forward.1} parent=1 // pred_check_branch
      %1799 = sbr.rel (0) target = $region105
    $region104: #{decoder_lstm_att_forward.1} parent=1 // pred_region
      %s1801 = ssub.s32 128, 128
      %1802 = vsyncadd [#allocation5], %s1801
      %s1804 = sshll.u32 [#allocation19], 4
      %s1805 = int_to_ptr.vmem [resolvable:$true] %s1804
      %1807 = dma.vmem_to_hbm [thread:$0]  %s1805, 128, %s16, [#allocation5]
    $region105: #{decoder_lstm_att_forward.1} parent=1 // pred_fallthru
      _
    // Predicated region
    $region106: #{decoder_lstm_att_forward.1} parent=1 // pred_check
      _
    $region107: #{decoder_lstm_att_forward.1} parent=1 // pred_check_branch
      %1809 = sbr.rel (0) target = $region109
    $region108: #{decoder_lstm_att_forward.1} parent=1 // pred_region
      %s1811 = ssub.s32 128, 128
      %1812 = vsyncadd [#allocation21], %s1811
      %s1814 = sshll.u32 [#allocation20], 4
      %s1815 = int_to_ptr.vmem [resolvable:$true] %s1814
      %1817 = dma.vmem_to_hbm [thread:$0]  %s1815, 128, %s17, [#allocation21]
    $region109: #{decoder_lstm_att_forward.1} parent=1 // pred_fallthru
      _
    // Predicated region
    $region110: #{decoder_lstm_att_forward.1} parent=1 // pred_check
      _
    $region111: #{decoder_lstm_att_forward.1} parent=1 // pred_check_branch
      %1819 = sbr.rel (0) target = $region113
    $region112: #{decoder_lstm_att_forward.1} parent=1 // pred_region
      %s1821 = ssub.s32 128, 128
      %1822 = vsyncadd [#allocation21], %s1821
      %s1824 = sshll.u32 [#allocation22], 4
      %s1825 = int_to_ptr.vmem [resolvable:$true] %s1824
      %1827 = dma.vmem_to_hbm [thread:$0]  %s1825, 128, %s18, [#allocation21]
    $region113: #{decoder_lstm_att_forward.1} parent=1 // pred_fallthru
      _
    // Predicated region
    $region114: #{decoder_lstm_att_forward.1} parent=1 // pred_check
      _
    $region115: #{decoder_lstm_att_forward.1} parent=1 // pred_check_branch
      %1829 = sbr.rel (0) target = $region117
    $region116: #{decoder_lstm_att_forward.1} parent=1 // pred_region
      %1830 = dma.done [#allocation5], 128
    $region117: #{decoder_lstm_att_forward.1} parent=1 // pred_fallthru
      _
    // Predicated region
    $region118: #{decoder_lstm_att_forward.1} parent=1 // pred_check
      _
    $region119: #{decoder_lstm_att_forward.1} parent=1 // pred_check_branch
      %1832 = sbr.rel (0) target = $region121
    $region120: #{decoder_lstm_att_forward.1} parent=1 // pred_region
      %1833 = dma.done [#allocation21], 128
    $region121: #{decoder_lstm_att_forward.1} parent=1 // pred_fallthru
      _
    // Predicated region
    $region122: #{decoder_lstm_att_forward.1} parent=1 // pred_check
      _
    $region123: #{decoder_lstm_att_forward.1} parent=1 // pred_check_branch
      %1835 = sbr.rel (0) target = $region125
    $region124: #{decoder_lstm_att_forward.1} parent=1 // pred_region
      %1836 = dma.done [#allocation21], 128
    $region125: #{decoder_lstm_att_forward.1} parent=1 // pred_fallthru
      _
    %1837 = vsyncpa [#allocation4], 1
    %1838 = vsyncpa [#allocation9], 1
    %1839 = vsyncpa [#allocation12], 1
    %1840 = vsyncpa [#allocation15], 1
    %1841 = vsyncpa [#allocation18], 1
    %1842 = vsyncpa [#allocation5], 1
    %1843 = vsyncpa [#allocation21], 1
    %1844 = vsyncpa [#allocation6], 1

</llo_original>
